<compile_context>
chip_gen: v5e
topology: v5e:2x2
jax: 0.10.0
libtpu: 0.0.40
codegen_flags: <defaults>
</compile_context>

<pallas_src>
import functools

import jax
import jax.numpy as jnp
import numpy as np
from jax.experimental import pallas as pl
from jax.experimental.pallas import tpu as pltpu


def _round_up(x, m):
    return ((x + m - 1) // m) * m


def _cdiv(a, b):
    return -(-a // b)


# ----------------------- weight / BN preparation (hoisted) -------------------

def prepare_conv_weights(w_oihw, gamma, beta, mean, var, *, col_tile, eps=1e-5):
    """Fold BN into the 3x3/s2 conv and build the extended-K block-diagonal
    weight used by the Pallas kernel.  Inference constants: call once."""
    Cout, Cin, _, _ = w_oihw.shape
    C4 = 4 * Cin
    TW = col_tile
    KW = (TW + 1) * C4
    NW = TW * Cout

    scale = gamma / jnp.sqrt(var + eps)                        # (Cout,)
    shift = beta - mean * scale                                # (Cout,)
    w_s = w_oihw * scale[:, None, None, None]                  # (Cout,Cin,3,3)

    # taps w_tap[dy, dx], K ordered (py, px, ci) to match the s2d lane order
    w2 = jnp.zeros((2, 2, 2, 2, Cin, Cout), jnp.float32)       # (dy,dx,py,px,ci,co)
    for ky in range(3):
        for kx in range(3):
            w2 = w2.at[ky // 2, kx // 2, ky % 2, kx % 2].set(w_s[:, :, ky, kx].T)
    w_tap = w2.reshape(2, 2, C4, Cout)

    # Extended-K block diagonal: output tile-column c reads input s2d columns
    # c (dx=0) and c+1 (dx=1) of a (TW+1)-column LHS slice, so dx needs no
    # separate matmul and no 64-lane-offset slicing inside the kernel.
    w_ext = jnp.zeros((2, KW, NW), jnp.float32)
    for c in range(TW):
        for dx in range(2):
            w_ext = w_ext.at[:, (c + dx) * C4:(c + dx + 1) * C4,
                             c * Cout:(c + 1) * Cout].set(w_tap[:, dx])
    w_ext = w_ext.astype(jnp.bfloat16)
    shift_t = jnp.tile(shift, TW).reshape(1, NW).astype(jnp.float32)
    return w_ext, shift_t


# ------------------- branch 1: conv3x3 s2 + BN + ReLU kernel ------------------

def _conv_band_kernel(xm_ref, xh_ref, w_ref, shift_ref, o_ref, s1_ref,
                      *, TH, TW, n_ct, c4, kw, nw):
    # xm_ref:    (TH, L)       bf16  s2d rows [b*TH, b*TH+TH)       (dy=0 view)
    # xh_ref:    (8,  L)       bf16  s2d rows [b*TH+TH, +8); only row 0 used
    # w_ref:     (2, KW, NW)   bf16  extended-K block-diag weight (BN folded)
    # shift_ref: (1, NW)       f32   BN shift, tiled per output column
    # o_ref:     (TH, Wo_pad*Cout) f32
    # s1_ref:    (TH, L)       bf16  scratch: dy=1 view (rows shifted down by 1)
    #
    # One sublane-shifted copy per band (instead of per-tile unaligned slices).
    s1_ref[0:TH - 1, :] = xm_ref[1:TH, :]
    s1_ref[TH - 1:TH, :] = xh_ref[0:1, :]
    shift = shift_ref[...]

    def tile(base, obase):
        lhs0 = xm_ref[:, pl.ds(base, kw)]      # aligned rows, lane-aligned base
        lhs1 = s1_ref[:, pl.ds(base, kw)]
        acc = jnp.dot(lhs0, w_ref[0], preferred_element_type=jnp.float32)
        acc = acc + jnp.dot(lhs1, w_ref[1], preferred_element_type=jnp.float32)
        o_ref[:, pl.ds(obase, nw)] = jnp.maximum(acc + shift, 0.0)

    if n_ct <= 8:                              # narrow: static unroll
        for ct in range(n_ct):
            tile(ct * TW * c4, ct * nw)
    else:                                      # wide images: bound live ranges
        def body(ct, carry):
            tile(pl.multiple_of(ct * (TW * c4), TW * c4),
                 pl.multiple_of(ct * nw, nw))
            return carry
        jax.lax.fori_loop(0, n_ct, body, 0)


def _derive_vmem_limit(TH, L, KW, NW, out_lanes):
    in_bytes = 2 * (TH * L * 2) + 2 * (8 * L * 2)      # xm + xh, double buffered
    w_bytes = 2 * (2 * KW * NW * 2) + 2 * (NW * 4)     # weight + shift
    out_bytes = 2 * (TH * out_lanes * 4)               # f32 out, double buffered
    scratch = TH * L * 2
    total = in_bytes + w_bytes + out_bytes + scratch
    # Generous headroom for compiler scratch, capped well under v7x's 64 MiB.
    return int(min(max(2 * total + (6 << 20), 16 << 20), 60 << 20))


def pallas_conv3x3_s2_bn_relu(x_nchw, w_ext, shift_t, *, col_tile,
                              band_rows_cap=256, vmem_row_budget=20 << 20):
    """3x3 conv, stride 2, pad 1, no bias; folded BN (inference) + ReLU.
    w_ext / shift_t come from prepare_conv_weights (hoisted constants)."""
    N, Cin, H, W = x_nchw.shape
    TW = col_tile
    C4 = 4 * Cin
    NW = shift_t.shape[1]
    Cout = NW // TW
    KW = (TW + 1) * C4
    assert w_ext.shape == (2, KW, NW)

    Ho, Wo = (H + 1) // 2, (W + 1) // 2
    n_ct = _cdiv(Wo, TW)
    Wo_pad = n_ct * TW
    Ws = Wo_pad + 1                           # +1 zero column for the dx=1 tap
    L = Ws * C4
    out_lanes = Wo_pad * Cout

    # Row geometry: batch flattened into the row axis; one extra (junk) row per
    # image so the dy=1 tap of the last real output row stays inside the image.
    Hrows = Ho + 1
    R = N * Hrows
    per_row_bytes = 2 * 2 * L + 2 * L + 2 * out_lanes * 4
    th_fit = max(8, (vmem_row_budget // max(per_row_bytes, 1)) // 8 * 8)
    TH = int(min(band_rows_cap, th_fit, _round_up(R, 8)))
    n_bands = _cdiv(R, TH)
    if n_bands == 1 and R > 8:
        TH = int(_round_up(_cdiv(R, 2), 8))   # keep >=2 parallel steps (v7x 2 TCs)
        n_bands = _cdiv(R, TH)
    R_pad = n_bands * TH

    # --- space-to-depth (pixel unshuffle) to a lane-dense bf16 slab ----------
    # TODO(synk): for production HRNet resolutions, fold this transform into the
    # kernel with strided make_async_copy DMAs instead of an XLA transpose.
    xq = x_nchw.astype(jnp.bfloat16)
    xp = jnp.pad(xq, ((0, 0), (0, 0),
                      (1, 2 * Hrows - H - 1), (1, 2 * Ws - W - 1)))
    x2d = xp.reshape(N, Cin, Hrows, 2, Ws, 2)
    x2d = jnp.transpose(x2d, (0, 2, 4, 3, 5, 1)).reshape(R, L)
    flat = jnp.pad(x2d, ((0, R_pad + 8 - R), (0, 0)))          # +8 zero halo rows

    vmem_limit = _derive_vmem_limit(TH, L, KW, NW, out_lanes)

    kernel = functools.partial(_conv_band_kernel, TH=TH, TW=TW, n_ct=n_ct,
                               c4=C4, kw=KW, nw=NW)
    out = pl.pallas_call(
        kernel,
        out_shape=jax.ShapeDtypeStruct((R_pad, out_lanes), jnp.float32),
        grid=(n_bands,),
        in_specs=[
            pl.BlockSpec((TH, L), lambda b: (b, 0)),
            pl.BlockSpec((8, L), lambda b: ((b + 1) * (TH // 8), 0)),
            pl.BlockSpec((2, KW, NW), lambda b: (0, 0, 0)),
            pl.BlockSpec((1, NW), lambda b: (0, 0)),
        ],
        out_specs=pl.BlockSpec((TH, out_lanes), lambda b: (b, 0)),
        scratch_shapes=[pltpu.VMEM((TH, L), jnp.bfloat16)],
        compiler_params=pltpu.CompilerParams(
            dimension_semantics=("parallel",),
            vmem_limit_bytes=vmem_limit),
    )(flat, flat, w_ext, shift_t)

    out = out[:R].reshape(N, Hrows, Wo_pad, Cout)[:, :Ho, :Wo, :]
    return jnp.transpose(out, (0, 3, 1, 2))      # back to the module's NCHW


# ------------------------------- forward --------------------------------------

def fuse_module_forward(x_list_nchw, w_ext, shift_t, *, col_tile):
    x0 = x_list_nchw[0]
    # fuse_layers[0][0] is None -> y0 = relu(x0).  Plain jnp op (XLA fuses it);
    # a dedicated pallas_call cost more than the compute at this size.
    y0 = jnp.maximum(x0, 0.0)
    # fuse_layers[1][0] = ConvBNReLU(16->32, k=3, s=2); the module's outer relu
    # is idempotent on the ConvBNReLU output.
    y1 = pallas_conv3x3_s2_bn_relu(x0, w_ext, shift_t, col_tile=col_tile)
    return [y0, y1]


# ------------------------------ references ------------------------------------

def fuse_module_reference_f32(x_list_nchw, params, eps=1e-5):
    x0 = x_list_nchw[0]
    y0 = jnp.maximum(x0, 0.0)
    scale = params["gamma"] / jnp.sqrt(params["var"] + eps)
    shift = params["beta"] - params["mean"] * scale
    x_nhwc = jnp.transpose(x0, (0, 2, 3, 1))
    w_hwio = jnp.transpose(params["w"], (2, 3, 1, 0))
    conv = jax.lax.conv_general_dilated(
        x_nhwc, w_hwio, window_strides=(2, 2), padding=((1, 1), (1, 1)),
        dimension_numbers=("NHWC", "HWIO", "NHWC"),
        precision=jax.lax.Precision.HIGHEST)
    y1 = jnp.maximum(conv * scale + shift, 0.0)
    return [y0, jnp.transpose(y1, (0, 3, 1, 2))]


def conv_reference_bf16_inputs(x0, params, eps=1e-5):
    """Same math as the Pallas conv kernel (scale folded, bf16-quantised x/w)."""
    scale = params["gamma"] / jnp.sqrt(params["var"] + eps)
    shift = params["beta"] - params["mean"] * scale
    wq = (params["w"] * scale[:, None, None, None]
          ).astype(jnp.bfloat16).astype(jnp.float32)
    xq = x0.astype(jnp.bfloat16).astype(jnp.float32)
    x_nhwc = jnp.transpose(xq, (0, 2, 3, 1))
    w_hwio = jnp.transpose(wq, (2, 3, 1, 0))
    conv = jax.lax.conv_general_dilated(
        x_nhwc, w_hwio, window_strides=(2, 2), padding=((1, 1), (1, 1)),
        dimension_numbers=("NHWC", "HWIO", "NHWC"),
        precision=jax.lax.Precision.HIGHEST)
    y1 = jnp.maximum(conv + shift, 0.0)
    return jnp.transpose(y1, (0, 3, 1, 2))


# --------------------------------- main ---------------------------------------

if __name__ == "__main__":
    N, Cin, H, W = 2, 16, 16, 16        # module default: in_channels=[16]
    Cout = 32

    key = jax.random.PRNGKey(0)
    kx, kw, kg, kb, km, kv = jax.random.split(key, 6)
    x0 = jax.random.normal(kx, (N, Cin, H, W), dtype=jnp.float32)
    params = {
        "w": 0.1 * jax.random.normal(kw, (Cout, Cin, 3, 3), dtype=jnp.float32),
        "gamma": 1.0 + 0.1 * jax.random.normal(kg, (Cout,), dtype=jnp.float32),
        "beta": 0.1 * jax.random.normal(kb, (Cout,), dtype=jnp.float32),
        "mean": 0.05 * jax.random.normal(km, (Cout,), dtype=jnp.float32),
        "var": 1.0 + jax.nn.softplus(
            jax.random.normal(kv, (Cout,), dtype=jnp.float32)),
    }

    Wo = (W + 1) // 2
    TW = 8 if Wo >= 8 else 4            # 256-lane result tiles (v6e/v7x); else 128
    # Hoisted inference constants: BN fold + extended-K block-diagonal weight.
    w_ext, shift_t = prepare_conv_weights(params["w"], params["gamma"],
                                          params["beta"], params["mean"],
                                          params["var"], col_tile=TW)

    fwd = jax.jit(functools.partial(fuse_module_forward, col_tile=TW))
    y0, y1 = fwd([x0], w_ext, shift_t)
    y0 = jax.block_until_ready(y0)
    y1 = jax.block_until_ready(y1)

    # Branch 0 is exact f32.
    r0, r1_f32 = fuse_module_reference_f32([x0], params)
    np.testing.assert_allclose(np.asarray(y0), np.asarray(r0), rtol=0, atol=1e-6)

    # Branch 1: strict check against a reference using the kernel's exact math
    # (BN scale folded into weights, bf16-quantised x/w, f32 accumulation) ...
    r1_q = conv_reference_bf16_inputs(x0, params)
    np.testing.assert_allclose(np.asarray(y1), np.asarray(r1_q),
                               rtol=1e-4, atol=1e-4)
    # ... plus a loose check against the full-f32 module reference
    # (bf16 input/weight cast is the only deviation).
    np.testing.assert_allclose(np.asarray(y1), np.asarray(r1_f32),
                               rtol=5e-2, atol=5e-2)

    print("KERNEL_OK")
</pallas_src>

<mosaic_0001>
module attributes {stable_mosaic.version = 11 : i64} {
  func.func @_conv_band_kernel(%arg0: i32, %arg1: memref<16x576xbf16, #tpu.memory_space<vmem>>, %arg2: memref<8x576xbf16, #tpu.memory_space<vmem>>, %arg3: memref<2x576x256xbf16, #tpu.memory_space<vmem>>, %arg4: memref<1x256xf32, #tpu.memory_space<vmem>>, %arg5: memref<16x256xf32, #tpu.memory_space<vmem>>, %arg6: memref<16x576xbf16, #tpu.memory_space<vmem>>) attributes {dimension_semantics = [#tpu.dimension_semantics<parallel>], iteration_bounds = array<i64: 2>, scalar_prefetch = 0 : i64, scratch_operands = 1 : i64, tpu.core_type = #tpu.core_type<tc>, window_params = [{transform_indices = @transform_0, window_bounds = array<i64: 16, 576>}, {transform_indices = @transform_1, window_bounds = array<i64: 8, 576>}, {pipeline_mode = #tpu.pipeline_mode<synchronous>, transform_indices = @transform_2, window_bounds = array<i64: 2, 576, 256>}, {pipeline_mode = #tpu.pipeline_mode<synchronous>, transform_indices = @transform_3, window_bounds = array<i64: 1, 256>}, {transform_indices = @transform_4, window_bounds = array<i64: 16, 256>}]} {
    %c1 = arith.constant 1 : index
    %c0 = arith.constant 0 : index
    %0 = vector.load %arg1[%c1, %c0] : memref<16x576xbf16, #tpu.memory_space<vmem>>, vector<15x576xbf16>
    %c0_0 = arith.constant 0 : index
    %c0_1 = arith.constant 0 : index
    %1 = vector.load %arg6[%c0_0, %c0_1] : memref<16x576xbf16, #tpu.memory_space<vmem>>, vector<15x576xbf16>
    tpu.vector_store %arg6[%c0_0, %c0_1], %0 {strides = array<i32>} : memref<16x576xbf16, #tpu.memory_space<vmem>>, vector<15x576xbf16>,
    %c0_2 = arith.constant 0 : index
    %c0_3 = arith.constant 0 : index
    %2 = vector.load %arg2[%c0_2, %c0_3] : memref<8x576xbf16, #tpu.memory_space<vmem>>, vector<1x576xbf16>
    %c15 = arith.constant 15 : index
    %c0_4 = arith.constant 0 : index
    %3 = vector.load %arg6[%c15, %c0_4] : memref<16x576xbf16, #tpu.memory_space<vmem>>, vector<1x576xbf16>
    tpu.vector_store %arg6[%c15, %c0_4], %2 {strides = array<i32>} : memref<16x576xbf16, #tpu.memory_space<vmem>>, vector<1x576xbf16>,
    %c0_5 = arith.constant 0 : index
    %c0_6 = arith.constant 0 : index
    %4 = vector.load %arg4[%c0_5, %c0_6] : memref<1x256xf32, #tpu.memory_space<vmem>>, vector<1x256xf32>
    %c0_7 = arith.constant 0 : index
    %c0_8 = arith.constant 0 : index
    %5 = vector.load %arg1[%c0_7, %c0_8] : memref<16x576xbf16, #tpu.memory_space<vmem>>, vector<16x576xbf16>
    %c0_9 = arith.constant 0 : index
    %c0_10 = arith.constant 0 : index
    %6 = vector.load %arg6[%c0_9, %c0_10] : memref<16x576xbf16, #tpu.memory_space<vmem>>, vector<16x576xbf16>
    %c0_11 = arith.constant 0 : index
    %c0_12 = arith.constant 0 : index
    %c0_13 = arith.constant 0 : index
    %7 = vector.load %arg3[%c0_11, %c0_12, %c0_13] : memref<2x576x256xbf16, #tpu.memory_space<vmem>>, vector<1x576x256xbf16>
    %8 = vector.shape_cast %7 : vector<1x576x256xbf16> to vector<576x256xbf16>
    %cst = arith.constant dense<0.000000e+00> : vector<16x256xf32>
    %9 = tpu.matmul %5, %8, %cst {dimension_numbers = #tpu.dot_dimension_numbers<[1], [0], [0], [1], [0, 0, 1, 1], [], []>} : vector<16x576xbf16>, vector<576x256xbf16>, vector<16x256xf32> -> vector<16x256xf32>
    %c1_14 = arith.constant 1 : index
    %c0_15 = arith.constant 0 : index
    %c0_16 = arith.constant 0 : index
    %10 = vector.load %arg3[%c1_14, %c0_15, %c0_16] : memref<2x576x256xbf16, #tpu.memory_space<vmem>>, vector<1x576x256xbf16>
    %11 = vector.shape_cast %10 : vector<1x576x256xbf16> to vector<576x256xbf16>
    %cst_17 = arith.constant dense<0.000000e+00> : vector<16x256xf32>
    %12 = tpu.matmul %6, %11, %cst_17 {dimension_numbers = #tpu.dot_dimension_numbers<[1], [0], [0], [1], [0, 0, 1, 1], [], []>} : vector<16x576xbf16>, vector<576x256xbf16>, vector<16x256xf32> -> vector<16x256xf32>
    %13 = arith.addf %9, %12 : vector<16x256xf32>
    %14 = vector.broadcast %4 : vector<1x256xf32> to vector<16x256xf32>
    %15 = arith.addf %13, %14 : vector<16x256xf32>
    %cst_18 = arith.constant 0.000000e+00 : f32
    %16 = vector.broadcast %cst_18 : f32 to vector<16x256xf32>
    %17 = arith.maximumf %15, %16 : vector<16x256xf32>
    %c0_19 = arith.constant 0 : index
    %c0_20 = arith.constant 0 : index
    %18 = vector.load %arg5[%c0_19, %c0_20] : memref<16x256xf32, #tpu.memory_space<vmem>>, vector<16x256xf32>
    tpu.vector_store %arg5[%c0_19, %c0_20], %17 {strides = array<i32>} : memref<16x256xf32, #tpu.memory_space<vmem>>, vector<16x256xf32>,
    return
  }
  func.func @transform_0(%arg0: i32) -> (i32, i32) {
    %c0_i32 = arith.constant 0 : i32
    %c0_i32_0 = arith.constant 0 : i32
    return %arg0, %c0_i32 : i32, i32
  }
  func.func @transform_1(%arg0: i32) -> (i32, i32) {
    %c1_i32 = arith.constant 1 : i32
    %0 = arith.addi %arg0, %c1_i32 : i32
    %c2_i32 = arith.constant 2 : i32
    %1 = arith.muli %0, %c2_i32 : i32
    %c0_i32 = arith.constant 0 : i32
    %c0_i32_0 = arith.constant 0 : i32
    return %1, %c0_i32 : i32, i32
  }
  func.func @transform_2(%arg0: i32) -> (i32, i32, i32) {
    %c0_i32 = arith.constant 0 : i32
    %c0_i32_0 = arith.constant 0 : i32
    %c0_i32_1 = arith.constant 0 : i32
    %c0_i32_2 = arith.constant 0 : i32
    return %c0_i32, %c0_i32_0, %c0_i32_1 : i32, i32, i32
  }
  func.func @transform_3(%arg0: i32) -> (i32, i32) {
    %c0_i32 = arith.constant 0 : i32
    %c0_i32_0 = arith.constant 0 : i32
    %c0_i32_1 = arith.constant 0 : i32
    return %c0_i32, %c0_i32_0 : i32, i32
  }
  func.func @transform_4(%arg0: i32) -> (i32, i32) {
    %c0_i32 = arith.constant 0 : i32
    %c0_i32_0 = arith.constant 0 : i32
    return %arg0, %c0_i32 : i32, i32
  }
}

</mosaic_0001>

<llo_original>
// kernel: fuse_module_forward.1
$region0: #{fuse_module_forward.1}
  #allocation0 [shape = 'u32[]', space=smem, size = 0x4, offset = 0x4, fixed_abs, tag = 'smem constant byte address 0x4 - core index']
  #allocation1 [shape = 'u32[72,128]{1,0:T(1,128)}', space=vmem, size = 0x9000, scoped, tag = 'internal scratch']
  #allocation2 [shape = 'bf16[16,576]{1,0:T(8,128)(2,1)}', space=vmem, size = 0x5000, scoped, tag = 'scratch operand']
  %s0 = inlined_call_operand.vmem [shape: bf16[40,576], index: 0, kind: input, shape index: {}, may-alias: {0,1}]
  %s1 = inlined_call_operand.vmem [shape: bf16[40,576], index: 1, kind: input, shape index: {}, may-alias: {0,1}]
  %s2 = inlined_call_operand.vmem [shape: bf16[2,576,256], index: 2, kind: input, shape index: {}]
  %s3 = inlined_call_operand.vmem [shape: f32[1,256], index: 3, kind: input, shape index: {}]
  %s4 = inlined_call_operand.vmem [shape: f32[32,256], index: 4, kind: output, shape index: {}]
  %s5 = sld [smem:[#allocation0]]
  $region49: #{fuse_module_forward.1} parent=0
    _
  %s7 = ssub.s32 1, %s5
  %s8 = scalar_select 0, %s7, %s5
  loop: start=0, step=1, limit=4
  $region2: #{fuse_module_forward.1} parent=0 // loop_pre_header
    _
  $region3: #{fuse_module_forward.1} parent=0 // loop_header
    %s10 = sphi 0, %s14
    %p11 = scmp.ge.s32.totalorder %s10, 4
    %s20 = sphi 0, %s22
    %s23 = sphi 0, %s20
    %s24 = sphi 0, %s23
    %s40 = sphi 0, %s24
    %s50 = sphi 0, %s52
    %s53 = sphi 0, %s50
    %s54 = sphi 0, %s53
    %s70 = sphi 0, %s54
    %s74 = sphi 0, %s74
    %s76 = sphi 0, %s74
    %s77 = sphi 0, %s76
    %s91 = sphi 0, %s77
    %s95 = sphi 0, %s95
    %s97 = sphi 0, %s95
    %s98 = sphi 0, %s97
    %s112 = sphi 0, %s98
    %s118 = sphi 0, %s120
    %s121 = sphi 0, %s118
    %s122 = sphi 0, %s121
    %s138 = sphi 0, %s122
  $region4: #{fuse_module_forward.1} parent=0 // loop_header_branch
    %13 = sbr.rel (%p11) target = $region8
  $region5: #{fuse_module_forward.1} parent=0 // loop_body
    %s15 = ssub.s32 %s10, 1
    %s16 = ssub.s32 %s10, 2
    %s17 = sadd.s32 %s10, 1
    %s18 = ssub.s32 %s10, %s17
    %p19 = scmp.eq.s32.totalorder %s18, 0
    %s21 = sadd.s32 %s20, 1
    %s22 = scalar_select %p19, %s20, %s21
    %p25 = pneg %p19
    %p26 = scmp.eq.s32.totalorder %s10, 1
    %p27 = por %p25, %p26
    %p28 = scmp.ne.s32.totalorder %s20, %s23
    %p29 = scmp.eq.s32.totalorder %s10, 0
    %p30 = por %p28, %p29
    %p31 = scmp.ne.s32.totalorder %s20, %s23
    %p32 = scmp.eq.s32.totalorder %s15, 1
    %p33 = por %p31, %p32
    %p34 = scmp.ne.s32.totalorder %s23, %s24
    %p35 = scmp.eq.s32.totalorder %s15, 0
    %p36 = por %p34, %p35
    %p37 = scmp.ne.s32.totalorder %s23, %s24
    %p38 = scmp.eq.s32.totalorder %s16, 1
    %p39 = por %p37, %p38
    %p41 = scmp.ne.s32.totalorder %s24, %s40
    %p42 = scmp.eq.s32.totalorder %s16, 0
    %p43 = por %p41, %p42
    %s44 = sadd.s32 %s10, 1
    %s45 = smul.u32 %s44, 2
    %s46 = sadd.s32 %s17, 1
    %s47 = smul.u32 %s46, 2
    %s48 = ssub.s32 %s45, %s47
    %p49 = scmp.eq.s32.totalorder %s48, 0
    %s51 = sadd.s32 %s50, 1
    %s52 = scalar_select %p49, %s50, %s51
    %p55 = pneg %p49
    %p56 = scmp.eq.s32.totalorder %s10, 1
    %p57 = por %p55, %p56
    %p58 = scmp.ne.s32.totalorder %s50, %s53
    %p59 = scmp.eq.s32.totalorder %s10, 0
    %p60 = por %p58, %p59
    %p61 = scmp.ne.s32.totalorder %s50, %s53
    %p62 = scmp.eq.s32.totalorder %s15, 1
    %p63 = por %p61, %p62
    %p64 = scmp.ne.s32.totalorder %s53, %s54
    %p65 = scmp.eq.s32.totalorder %s15, 0
    %p66 = por %p64, %p65
    %p67 = scmp.ne.s32.totalorder %s53, %s54
    %p68 = scmp.eq.s32.totalorder %s16, 1
    %p69 = por %p67, %p68
    %p71 = scmp.ne.s32.totalorder %s54, %s70
    %p72 = scmp.eq.s32.totalorder %s16, 0
    %p73 = por %p71, %p72
    %s75 = sadd.s32 %s74, 1
    %p78 = scmp.eq.s32.totalorder %s10, 1
    %p79 = scmp.ne.s32.totalorder %s74, %s76
    %p80 = scmp.eq.s32.totalorder %s10, 0
    %p81 = por %p79, %p80
    %p82 = scmp.ne.s32.totalorder %s74, %s76
    %p83 = scmp.eq.s32.totalorder %s15, 1
    %p84 = por %p82, %p83
    %p85 = scmp.ne.s32.totalorder %s76, %s77
    %p86 = scmp.eq.s32.totalorder %s15, 0
    %p87 = por %p85, %p86
    %p88 = scmp.ne.s32.totalorder %s76, %s77
    %p89 = scmp.eq.s32.totalorder %s16, 1
    %p90 = por %p88, %p89
    %p92 = scmp.ne.s32.totalorder %s77, %s91
    %p93 = scmp.eq.s32.totalorder %s16, 0
    %p94 = por %p92, %p93
    %s96 = sadd.s32 %s95, 1
    %p99 = scmp.eq.s32.totalorder %s10, 1
    %p100 = scmp.ne.s32.totalorder %s95, %s97
    %p101 = scmp.eq.s32.totalorder %s10, 0
    %p102 = por %p100, %p101
    %p103 = scmp.ne.s32.totalorder %s95, %s97
    %p104 = scmp.eq.s32.totalorder %s15, 1
    %p105 = por %p103, %p104
    %p106 = scmp.ne.s32.totalorder %s97, %s98
    %p107 = scmp.eq.s32.totalorder %s15, 0
    %p108 = por %p106, %p107
    %p109 = scmp.ne.s32.totalorder %s97, %s98
    %p110 = scmp.eq.s32.totalorder %s16, 1
    %p111 = por %p109, %p110
    %p113 = scmp.ne.s32.totalorder %s98, %s112
    %p114 = scmp.eq.s32.totalorder %s16, 0
    %p115 = por %p113, %p114
    %s116 = ssub.s32 %s10, %s17
    %p117 = scmp.eq.s32.totalorder %s116, 0
    %s119 = sadd.s32 %s118, 1
    %s120 = scalar_select %p117, %s118, %s119
    %p123 = pneg %p117
    %p124 = scmp.eq.s32.totalorder %s10, 1
    %p125 = por %p123, %p124
    %p126 = scmp.ne.s32.totalorder %s118, %s121
    %p127 = scmp.eq.s32.totalorder %s10, 0
    %p128 = por %p126, %p127
    %p129 = scmp.ne.s32.totalorder %s118, %s121
    %p130 = scmp.eq.s32.totalorder %s15, 1
    %p131 = por %p129, %p130
    %p132 = scmp.ne.s32.totalorder %s121, %s122
    %p133 = scmp.eq.s32.totalorder %s15, 0
    %p134 = por %p132, %p133
    %p135 = scmp.ne.s32.totalorder %s121, %s122
    %p136 = scmp.eq.s32.totalorder %s16, 1
    %p137 = por %p135, %p136
    %p139 = scmp.ne.s32.totalorder %s122, %s138
    %p140 = scmp.eq.s32.totalorder %s16, 0
    %p141 = por %p139, %p140
    %p142 = scmp.le.s32.totalorder 1, %s10
    %p143 = scmp.lt.s32.totalorder %s10, 3
    %p144 = pnand %p142, %p143
    %p145 = pneg %p144
    // Predicated region
    $region9: #{fuse_module_forward.1} parent=5 // pred_check
      _
    $region10: #{fuse_module_forward.1} parent=5 // pred_check_branch
      %147 = sbr.rel (%p144) target = $region12
    $region11: #{fuse_module_forward.1} parent=5 // pred_region
      %s148 = ssub.s32 %s10, 1
      // Predicated region
      $region13: #{fuse_module_forward.1} parent=11 // pred_check
        %p149 = pneg %p87
      $region14: #{fuse_module_forward.1} parent=11 // pred_check_branch
        %151 = sbr.rel (%p149) target = $region16
      $region15: #{fuse_module_forward.1} parent=11 // pred_region
        _
      $region16: #{fuse_module_forward.1} parent=11 // pred_fallthru
        _
      // Predicated region
      $region17: #{fuse_module_forward.1} parent=11 // pred_check
        %p152 = pneg %p108
      $region18: #{fuse_module_forward.1} parent=11 // pred_check_branch
        %154 = sbr.rel (%p152) target = $region20
      $region19: #{fuse_module_forward.1} parent=11 // pred_region
        _
      $region20: #{fuse_module_forward.1} parent=11 // pred_fallthru
        _
    $region12: #{fuse_module_forward.1} parent=5 // pred_fallthru
      _
    %p155 = scmp.lt.s32.totalorder %s10, 2
    // Predicated region
    $region21: #{fuse_module_forward.1} parent=5 // pred_check
      %p156 = pneg %p155
    $region22: #{fuse_module_forward.1} parent=5 // pred_check_branch
      %158 = sbr.rel (%p156) target = $region24
    $region23: #{fuse_module_forward.1} parent=5 // pred_region
      // Predicated region
      $region25: #{fuse_module_forward.1} parent=23 // pred_check
        %p159 = pneg %p30
      $region26: #{fuse_module_forward.1} parent=23 // pred_check_branch
        %161 = sbr.rel (%p159) target = $region28
      $region27: #{fuse_module_forward.1} parent=23 // pred_region
        %s162 = smul.u32 2, %s10
        %s163 = ssub.s32 5, %s162
        %p164 = scmp.lt.s32.totalorder %s163, 2
        %s165 = scalar_select %p164, %s163, 2
        %s166 = smul.u32 4, %s165
        %s167 = smul.u32 %s166, 5
        %p168 = scmp.lt.s32.totalorder %s162, 4
        %s169 = scalar_select %p168, %s162, 4
        %s170 = smul.addr %s169, 5
        %s171 = smul.addr %s170, 4
        %s172 = scalar_lea.vmem %s0, %s171
        %s173 = smul.u32 2, %s10
        %s174 = ssub.s32 5, %s173
        %p175 = scmp.lt.s32.totalorder %s174, 2
        %s176 = scalar_select %p175, %s174, 2
        %s177 = smul.u32 4, %s176
        %s178 = smul.u32 %s177, 5
      $region28: #{fuse_module_forward.1} parent=23 // pred_fallthru
        _
      // Predicated region
      $region29: #{fuse_module_forward.1} parent=23 // pred_check
        %p179 = pneg %p60
      $region30: #{fuse_module_forward.1} parent=23 // pred_check_branch
        %181 = sbr.rel (%p179) target = $region32
      $region31: #{fuse_module_forward.1} parent=23 // pred_region
        %s182 = sadd.s32 %s10, 1
        %s183 = smul.u32 %s182, 2
        %p184 = scmp.lt.s32.totalorder %s183, 4
        %s185 = scalar_select %p184, %s183, 4
        %s186 = smul.addr %s185, 5
        %s187 = smul.addr %s186, 4
        %s188 = scalar_lea.vmem %s1, %s187
        %s189 = sadd.s32 %s10, 1
        %s190 = smul.u32 %s189, 2
      $region32: #{fuse_module_forward.1} parent=23 // pred_fallthru
        _
    $region24: #{fuse_module_forward.1} parent=5 // pred_fallthru
      _
    %p191 = scmp.le.s32.totalorder 1, %s10
    %p192 = scmp.lt.s32.totalorder %s10, 3
    %p193 = pnand %p191, %p192
    %p194 = pneg %p193
    // Predicated region
    $region33: #{fuse_module_forward.1} parent=5 // pred_check
      _
    $region34: #{fuse_module_forward.1} parent=5 // pred_check_branch
      %196 = sbr.rel (%p193) target = $region36
    $region35: #{fuse_module_forward.1} parent=5 // pred_region
      %s197 = ssub.s32 %s10, 1
      %s198 = smul.u32 2, %s15
      %s199 = ssub.s32 5, %s198
      %p200 = scmp.lt.s32.totalorder %s199, 2
      %s201 = scalar_select %p200, %s199, 2
      %s202 = smul.u32 4, %s201
      %s203 = smul.u32 %s202, 5
      %p204 = scmp.lt.s32.totalorder %s198, 4
      %s205 = scalar_select %p204, %s198, 4
      %s206 = smul.addr %s205, 5
      %s207 = smul.addr %s206, 4
      %s208 = scalar_lea.vmem %s0, %s207
      %p209 = pneg %p36
      %p210 = pneg %p33
      %s211 = sadd.s32 %s15, 1
      %s212 = smul.u32 %s211, 2
      %p213 = scmp.lt.s32.totalorder %s212, 4
      %s214 = scalar_select %p213, %s212, 4
      %s215 = smul.addr %s214, 5
      %s216 = smul.addr %s215, 4
      %s217 = scalar_lea.vmem %s1, %s216
      %p218 = pneg %p66
      %p219 = pneg %p63
      %p220 = pneg %p87
      %p221 = pneg %p84
      %p222 = pneg %p108
      %p223 = pneg %p105
      %p224 = pneg %p134
      %p225 = pneg %p131
      %s226 = smul.u32 2, %s15
      %p227 = scmp.lt.s32.totalorder %s226, 3
      %s228 = scalar_select %p227, %s226, 3
      %s229 = smul.addr %s228, 2
      %s230 = smul.addr %s229, 8
      %s231 = scalar_lea.vmem %s4, %s230
      %s232 = smul.u32 2, %s15
      %s233 = ssub.s32 5, %s232
      %p234 = scmp.lt.s32.totalorder %s233, 2
      %s235 = scalar_select %p234, %s233, 2
      %s236 = smul.u32 4, %s235
      %s237 = smul.u32 %s236, 5
      %p238 = scmp.lt.s32.totalorder %s232, 4
      %s239 = scalar_select %p238, %s232, 4
      %s240 = smul.addr %s239, 5
      %s241 = smul.addr %s240, 4
      %s242 = scalar_lea.vmem %s0, %s241
      %s243 = smul.u32 2, %s15
      %s244 = ssub.s32 5, %s243
      %p245 = scmp.lt.s32.totalorder %s244, 2
      %s246 = scalar_select %p245, %s244, 2
      %s247 = smul.u32 4, %s246
      %s248 = smul.u32 %s247, 5
      %s249 = sadd.s32 %s15, 1
      %s250 = smul.u32 %s249, 2
      %p251 = scmp.lt.s32.totalorder %s250, 4
      %s252 = scalar_select %p251, %s250, 4
      %s253 = smul.addr %s252, 5
      %s254 = smul.addr %s253, 4
      %s255 = scalar_lea.vmem %s1, %s254
      %s256 = sadd.s32 %s15, 1
      %s257 = smul.u32 %s256, 2
      %s258 = smul.u32 2, %s15
      %p259 = scmp.lt.s32.totalorder %s258, 3
      %s260 = scalar_select %p259, %s258, 3
      %s261 = smul.addr %s260, 2
      %s262 = smul.addr %s261, 8
      %s263 = scalar_lea.vmem %s4, %s262
      %s264 = smul.u32 2, %s15
      %v266 = vld [vmem:[%s242] sm:$0xff]
      %v267 = vld [vmem:[%s242 + $0x8] sm:$0xff]
      %v268 = vld [vmem:[%s242 + $0x10] sm:$0xf]
      %v269 = vld [vmem:[%s242 + $0x14] sm:$0xff]
      %v270 = vld [vmem:[%s242 + $0x1c] sm:$0xff]
      %v271 = vld [vmem:[%s242 + $0x24] sm:$0xf]
      %vm272 = vsmask.f32 3328
      %vm273 = vsmask.f32 7440
      %vm274 = vmor %vm272, %vm273
      %v276 = vshrl.u32 %v266, 16
      %v278 = vrot.slane %v276, 4
      %v279 = vshll.u32 %v266, 16
      %v281 = vrot.slane %v279, 5
      %v282 = vor.u32 %v278, %v281
      %v283 = vrot.slane %v282, 4
      %v285 = vshll.u32 %v269, 16
      %v287 = vrot.slane %v285, 5
      %v288 = vsel %vm274, %v283, %v287
      %v290 = vshrl.u32 %v267, 16
      %v292 = vrot.slane %v290, 4
      %v293 = vshll.u32 %v267, 16
      %v295 = vrot.slane %v293, 5
      %v296 = vor.u32 %v292, %v295
      %v297 = vrot.slane %v296, 4
      %v299 = vshll.u32 %v270, 16
      %v301 = vrot.slane %v299, 5
      %v302 = vsel %vm274, %v297, %v301
      %v304 = vshrl.u32 %v268, 16
      %v306 = vrot.slane %v304, 4
      %v307 = vshll.u32 %v268, 16
      %v309 = vrot.slane %v307, 5
      %v310 = vor.u32 %v306, %v309
      %v311 = vrot.slane %v310, 4
      %v313 = vshll.u32 %v271, 16
      %v315 = vrot.slane %v313, 5
      %v316 = vsel %vm274, %v311, %v315
      %v317 = vshrl.u32 %v269, 16
      %v319 = vrot.slane %v317, 4
      %v320 = vor.u32 %v319, %v287
      %v321 = vrot.slane %v320, 4
      %v322 = vshrl.u32 %v270, 16
      %v324 = vrot.slane %v322, 4
      %v325 = vor.u32 %v324, %v301
      %v326 = vrot.slane %v325, 4
      %v327 = vshrl.u32 %v271, 16
      %v329 = vrot.slane %v327, 4
      %v330 = vor.u32 %v329, %v315
      %v331 = vrot.slane %v330, 4
      %338 = vst [vmem:[#allocation2] sm:$0xff] %v288
      %339 = vst [vmem:[#allocation2 + $0x8] sm:$0xff] %v302
      %vm340 = vcmask 519168
      %341 = vst.msk [vmem:[#allocation2 + $0x10] sm:$0xf] %vm340, %v316
      %vm342 = vcmask 1043456
      %vm343 = vmand %vm342, %vm272
      %vm344 = vcmask 1047556
      %vm345 = vsmask.f32 7424
      %vm346 = vmand %vm344, %vm345
      %vm347 = vmor %vm346, %vm343
      %v348 = vld [vmem:[#allocation2 + $0x14] sm:$0xff]
      %v349 = vsel %vm347, %v321, %v348
      %350 = vst [vmem:[#allocation2 + $0x14] sm:$0xff] %v349
      %v351 = vld [vmem:[#allocation2 + $0x1c] sm:$0xff]
      %v352 = vsel %vm347, %v326, %v351
      %353 = vst [vmem:[#allocation2 + $0x1c] sm:$0xff] %v352
      %vm354 = vcmask 519168
      %vm355 = vmand %vm354, %vm272
      %v356 = vld [vmem:[#allocation2 + $0x24] sm:$0xf]
      %v357 = vsel %vm355, %v331, %v356
      %358 = vst [vmem:[#allocation2 + $0x24] sm:$0xf] %v357
      %v359 = vld [vmem:[%s255] sm:$0x11]
      %v360 = vld [vmem:[%s255 + $0x8] sm:$0x11]
      %v361 = vld [vmem:[%s255 + $0x10] sm:$0x1]
      %v363 = vshll.u32 %v359, 16
      %v365 = vrot.slane %v363, 5
      %v367 = vshll.u32 %v360, 16
      %v369 = vrot.slane %v367, 5
      %v371 = vshll.u32 %v361, 16
      %v373 = vrot.slane %v371, 5
      %vm377 = vcmask 1043459
      %vm378 = vsmask.f32 7950
      %vm379 = vmand %vm377, %vm378
      %vm380 = vcmask 1047559
      %vm381 = vsmask.f32 7966
      %vm382 = vmand %vm380, %vm381
      %vm383 = vmor %vm382, %vm379
      %v384 = vld [vmem:[#allocation2 + $0x14] sm:$0x88]
      %v385 = vsel %vm383, %v365, %v384
      %386 = vst [vmem:[#allocation2 + $0x14] sm:$0x88] %v385
      %v387 = vld [vmem:[#allocation2 + $0x1c] sm:$0x88]
      %v388 = vsel %vm383, %v369, %v387
      %389 = vst [vmem:[#allocation2 + $0x1c] sm:$0x88] %v388
      %vm390 = vcmask 519171
      %vm391 = vmand %vm390, %vm378
      %v392 = vld [vmem:[#allocation2 + $0x24] sm:$0x8]
      %v393 = vsel %vm391, %v373, %v392
      %394 = vst [vmem:[#allocation2 + $0x24] sm:$0x8] %v393
      %v395 = vld [vmem:[%s3] sm:$0x3]
      %v396 = vld [vmem:[%s242] sm:$0xff]
      %v397 = vld [vmem:[%s242 + $0x8] sm:$0xff]
      %v398 = vld [vmem:[%s242 + $0x10] sm:$0xf]
      %v399 = vld [vmem:[%s242 + $0x14] sm:$0xff]
      %v400 = vld [vmem:[%s242 + $0x1c] sm:$0xff]
      %v401 = vld [vmem:[%s242 + $0x24] sm:$0xf]
      %v402 = vld [vmem:[#allocation2] sm:$0xff]
      %v403 = vld [vmem:[#allocation2 + $0x8] sm:$0xff]
      %v404 = vld [vmem:[#allocation2 + $0x10] sm:$0xf]
      %v405 = vld [vmem:[#allocation2 + $0x14] sm:$0xff]
      %v406 = vld [vmem:[#allocation2 + $0x1c] sm:$0xff]
      %v407 = vld [vmem:[#allocation2 + $0x24] sm:$0xf]
      %v408 = vld [vmem:[%s2] sm:$0xff]
      %v409 = vld [vmem:[%s2 + $0x8] sm:$0xff]
      %v410 = vld [vmem:[%s2 + $0x10] sm:$0xff]
      %v411 = vld [vmem:[%s2 + $0x18] sm:$0xff]
      %v412 = vld [vmem:[%s2 + $0x20] sm:$0xff]
      %v413 = vld [vmem:[%s2 + $0x28] sm:$0xff]
      %v414 = vld [vmem:[%s2 + $0x30] sm:$0xff]
      %v415 = vld [vmem:[%s2 + $0x38] sm:$0xff]
      %v416 = vld [vmem:[%s2 + $0x40] sm:$0xff]
      %v417 = vld [vmem:[%s2 + $0x48] sm:$0xff]
      %v418 = vld [vmem:[%s2 + $0x50] sm:$0xff]
      %v419 = vld [vmem:[%s2 + $0x58] sm:$0xff]
      %v420 = vld [vmem:[%s2 + $0x60] sm:$0xff]
      %v421 = vld [vmem:[%s2 + $0x68] sm:$0xff]
      %v422 = vld [vmem:[%s2 + $0x70] sm:$0xff]
      %v423 = vld [vmem:[%s2 + $0x78] sm:$0xff]
      %v424 = vld [vmem:[%s2 + $0x80] sm:$0xff]
      %v425 = vld [vmem:[%s2 + $0x88] sm:$0xff]
      %v426 = vld [vmem:[%s2 + $0x90] sm:$0xff]
      %v427 = vld [vmem:[%s2 + $0x98] sm:$0xff]
      %v428 = vld [vmem:[%s2 + $0xa0] sm:$0xff]
      %v429 = vld [vmem:[%s2 + $0xa8] sm:$0xff]
      %v430 = vld [vmem:[%s2 + $0xb0] sm:$0xff]
      %v431 = vld [vmem:[%s2 + $0xb8] sm:$0xff]
      %v432 = vld [vmem:[%s2 + $0xc0] sm:$0xff]
      %v433 = vld [vmem:[%s2 + $0xc8] sm:$0xff]
      %v434 = vld [vmem:[%s2 + $0xd0] sm:$0xff]
      %v435 = vld [vmem:[%s2 + $0xd8] sm:$0xff]
      %v436 = vld [vmem:[%s2 + $0xe0] sm:$0xff]
      %v437 = vld [vmem:[%s2 + $0xe8] sm:$0xff]
      %v438 = vld [vmem:[%s2 + $0xf0] sm:$0xff]
      %v439 = vld [vmem:[%s2 + $0xf8] sm:$0xff]
      %v440 = vld [vmem:[%s2 + $0x100] sm:$0xff]
      %v441 = vld [vmem:[%s2 + $0x108] sm:$0xff]
      %v442 = vld [vmem:[%s2 + $0x110] sm:$0xff]
      %v443 = vld [vmem:[%s2 + $0x118] sm:$0xff]
      %v444 = vld [vmem:[%s2 + $0x120] sm:$0xff]
      %v445 = vld [vmem:[%s2 + $0x128] sm:$0xff]
      %v446 = vld [vmem:[%s2 + $0x130] sm:$0xff]
      %v447 = vld [vmem:[%s2 + $0x138] sm:$0xff]
      %v448 = vld [vmem:[%s2 + $0x140] sm:$0xff]
      %v449 = vld [vmem:[%s2 + $0x148] sm:$0xff]
      %v450 = vld [vmem:[%s2 + $0x150] sm:$0xff]
      %v451 = vld [vmem:[%s2 + $0x158] sm:$0xff]
      %v452 = vld [vmem:[%s2 + $0x160] sm:$0xff]
      %v453 = vld [vmem:[%s2 + $0x168] sm:$0xff]
      %v454 = vld [vmem:[%s2 + $0x170] sm:$0xff]
      %v455 = vld [vmem:[%s2 + $0x178] sm:$0xff]
      %v456 = vld [vmem:[%s2 + $0x180] sm:$0xff]
      %v457 = vld [vmem:[%s2 + $0x188] sm:$0xff]
      %v458 = vld [vmem:[%s2 + $0x190] sm:$0xff]
      %v459 = vld [vmem:[%s2 + $0x198] sm:$0xff]
      %v460 = vld [vmem:[%s2 + $0x1a0] sm:$0xff]
      %v461 = vld [vmem:[%s2 + $0x1a8] sm:$0xff]
      %v462 = vld [vmem:[%s2 + $0x1b0] sm:$0xff]
      %v463 = vld [vmem:[%s2 + $0x1b8] sm:$0xff]
      %v464 = vld [vmem:[%s2 + $0x1c0] sm:$0xff]
      %v465 = vld [vmem:[%s2 + $0x1c8] sm:$0xff]
      %v466 = vld [vmem:[%s2 + $0x1d0] sm:$0xff]
      %v467 = vld [vmem:[%s2 + $0x1d8] sm:$0xff]
      %v468 = vld [vmem:[%s2 + $0x1e0] sm:$0xff]
      %v469 = vld [vmem:[%s2 + $0x1e8] sm:$0xff]
      %v470 = vld [vmem:[%s2 + $0x1f0] sm:$0xff]
      %v471 = vld [vmem:[%s2 + $0x1f8] sm:$0xff]
      %v472 = vld [vmem:[%s2 + $0x200] sm:$0xff]
      %v473 = vld [vmem:[%s2 + $0x208] sm:$0xff]
      %v474 = vld [vmem:[%s2 + $0x210] sm:$0xff]
      %v475 = vld [vmem:[%s2 + $0x218] sm:$0xff]
      %v476 = vld [vmem:[%s2 + $0x220] sm:$0xff]
      %v477 = vld [vmem:[%s2 + $0x228] sm:$0xff]
      %v478 = vld [vmem:[%s2 + $0x230] sm:$0xff]
      %v479 = vld [vmem:[%s2 + $0x238] sm:$0xff]
      %s480 = scalar_lea.vmem %s2, 576
      %v481 = vld [vmem:[%s480] sm:$0xff]
      %v482 = vld [vmem:[%s480 + $0x8] sm:$0xff]
      %v483 = vld [vmem:[%s480 + $0x10] sm:$0xff]
      %v484 = vld [vmem:[%s480 + $0x18] sm:$0xff]
      %v485 = vld [vmem:[%s480 + $0x20] sm:$0xff]
      %v486 = vld [vmem:[%s480 + $0x28] sm:$0xff]
      %v487 = vld [vmem:[%s480 + $0x30] sm:$0xff]
      %v488 = vld [vmem:[%s480 + $0x38] sm:$0xff]
      %v489 = vld [vmem:[%s480 + $0x40] sm:$0xff]
      %v490 = vld [vmem:[%s480 + $0x48] sm:$0xff]
      %v491 = vld [vmem:[%s480 + $0x50] sm:$0xff]
      %v492 = vld [vmem:[%s480 + $0x58] sm:$0xff]
      %v493 = vld [vmem:[%s480 + $0x60] sm:$0xff]
      %v494 = vld [vmem:[%s480 + $0x68] sm:$0xff]
      %v495 = vld [vmem:[%s480 + $0x70] sm:$0xff]
      %v496 = vld [vmem:[%s480 + $0x78] sm:$0xff]
      %v497 = vld [vmem:[%s480 + $0x80] sm:$0xff]
      %v498 = vld [vmem:[%s480 + $0x88] sm:$0xff]
      %v499 = vld [vmem:[%s480 + $0x90] sm:$0xff]
      %v500 = vld [vmem:[%s480 + $0x98] sm:$0xff]
      %v501 = vld [vmem:[%s480 + $0xa0] sm:$0xff]
      %v502 = vld [vmem:[%s480 + $0xa8] sm:$0xff]
      %v503 = vld [vmem:[%s480 + $0xb0] sm:$0xff]
      %v504 = vld [vmem:[%s480 + $0xb8] sm:$0xff]
      %v505 = vld [vmem:[%s480 + $0xc0] sm:$0xff]
      %v506 = vld [vmem:[%s480 + $0xc8] sm:$0xff]
      %v507 = vld [vmem:[%s480 + $0xd0] sm:$0xff]
      %v508 = vld [vmem:[%s480 + $0xd8] sm:$0xff]
      %v509 = vld [vmem:[%s480 + $0xe0] sm:$0xff]
      %v510 = vld [vmem:[%s480 + $0xe8] sm:$0xff]
      %v511 = vld [vmem:[%s480 + $0xf0] sm:$0xff]
      %v512 = vld [vmem:[%s480 + $0xf8] sm:$0xff]
      %v513 = vld [vmem:[%s480 + $0x100] sm:$0xff]
      %v514 = vld [vmem:[%s480 + $0x108] sm:$0xff]
      %v515 = vld [vmem:[%s480 + $0x110] sm:$0xff]
      %v516 = vld [vmem:[%s480 + $0x118] sm:$0xff]
      %v517 = vld [vmem:[%s480 + $0x120] sm:$0xff]
      %v518 = vld [vmem:[%s480 + $0x128] sm:$0xff]
      %v519 = vld [vmem:[%s480 + $0x130] sm:$0xff]
      %v520 = vld [vmem:[%s480 + $0x138] sm:$0xff]
      %v521 = vld [vmem:[%s480 + $0x140] sm:$0xff]
      %v522 = vld [vmem:[%s480 + $0x148] sm:$0xff]
      %v523 = vld [vmem:[%s480 + $0x150] sm:$0xff]
      %v524 = vld [vmem:[%s480 + $0x158] sm:$0xff]
      %v525 = vld [vmem:[%s480 + $0x160] sm:$0xff]
      %v526 = vld [vmem:[%s480 + $0x168] sm:$0xff]
      %v527 = vld [vmem:[%s480 + $0x170] sm:$0xff]
      %v528 = vld [vmem:[%s480 + $0x178] sm:$0xff]
      %v529 = vld [vmem:[%s480 + $0x180] sm:$0xff]
      %v530 = vld [vmem:[%s480 + $0x188] sm:$0xff]
      %v531 = vld [vmem:[%s480 + $0x190] sm:$0xff]
      %v532 = vld [vmem:[%s480 + $0x198] sm:$0xff]
      %v533 = vld [vmem:[%s480 + $0x1a0] sm:$0xff]
      %v534 = vld [vmem:[%s480 + $0x1a8] sm:$0xff]
      %v535 = vld [vmem:[%s480 + $0x1b0] sm:$0xff]
      %v536 = vld [vmem:[%s480 + $0x1b8] sm:$0xff]
      %v537 = vld [vmem:[%s480 + $0x1c0] sm:$0xff]
      %v538 = vld [vmem:[%s480 + $0x1c8] sm:$0xff]
      %v539 = vld [vmem:[%s480 + $0x1d0] sm:$0xff]
      %v540 = vld [vmem:[%s480 + $0x1d8] sm:$0xff]
      %v541 = vld [vmem:[%s480 + $0x1e0] sm:$0xff]
      %v542 = vld [vmem:[%s480 + $0x1e8] sm:$0xff]
      %v543 = vld [vmem:[%s480 + $0x1f0] sm:$0xff]
      %v544 = vld [vmem:[%s480 + $0x1f8] sm:$0xff]
      %v545 = vld [vmem:[%s480 + $0x200] sm:$0xff]
      %v546 = vld [vmem:[%s480 + $0x208] sm:$0xff]
      %v547 = vld [vmem:[%s480 + $0x210] sm:$0xff]
      %v548 = vld [vmem:[%s480 + $0x218] sm:$0xff]
      %v549 = vld [vmem:[%s480 + $0x220] sm:$0xff]
      %v550 = vld [vmem:[%s480 + $0x228] sm:$0xff]
      %v551 = vld [vmem:[%s480 + $0x230] sm:$0xff]
      %v552 = vld [vmem:[%s480 + $0x238] sm:$0xff]
      %v559 = vunpack.c.l.b16 %v402
      %v560 = vunpack.c.h.b16 %v402
      %v561 = vunpack.c.l.b16 %v403
      %v562 = vunpack.c.h.b16 %v403
      %v563 = vunpack.c.l.b16 %v404
      %v564 = vunpack.c.l.b16 %v405
      %v565 = vunpack.c.h.b16 %v405
      %v566 = vunpack.c.l.b16 %v406
      %v567 = vunpack.c.h.b16 %v406
      %v568 = vunpack.c.l.b16 %v407
      %v569 = vpack.c.b16 %v564, %v559
      %v570 = vpack.c.b16 %v565, %v560
      %v571 = vpack.c.b16 %v566, %v561
      %v572 = vpack.c.b16 %v567, %v562
      %v573 = vpack.c.b16 %v568, %v563
      %v650 = vunpack.c.l.b16 %v481
      %v651 = vunpack.c.h.b16 %v481
      %v652 = vunpack.c.l.b16 %v482
      %v653 = vunpack.c.h.b16 %v482
      %v654 = vunpack.c.l.b16 %v483
      %v655 = vunpack.c.h.b16 %v483
      %v656 = vunpack.c.l.b16 %v484
      %v657 = vunpack.c.h.b16 %v484
      %v658 = vunpack.c.l.b16 %v485
      %v659 = vunpack.c.h.b16 %v485
      %v660 = vunpack.c.l.b16 %v486
      %v661 = vunpack.c.h.b16 %v486
      %v662 = vunpack.c.l.b16 %v487
      %v663 = vunpack.c.h.b16 %v487
      %v664 = vunpack.c.l.b16 %v488
      %v665 = vunpack.c.h.b16 %v488
      %v666 = vunpack.c.l.b16 %v489
      %v667 = vunpack.c.h.b16 %v489
      %v668 = vunpack.c.l.b16 %v490
      %v669 = vunpack.c.h.b16 %v490
      %v670 = vunpack.c.l.b16 %v491
      %v671 = vunpack.c.h.b16 %v491
      %v672 = vunpack.c.l.b16 %v492
      %v673 = vunpack.c.h.b16 %v492
      %v674 = vunpack.c.l.b16 %v493
      %v675 = vunpack.c.h.b16 %v493
      %v676 = vunpack.c.l.b16 %v494
      %v677 = vunpack.c.h.b16 %v494
      %v678 = vunpack.c.l.b16 %v495
      %v679 = vunpack.c.h.b16 %v495
      %v680 = vunpack.c.l.b16 %v496
      %v681 = vunpack.c.h.b16 %v496
      %v682 = vunpack.c.l.b16 %v497
      %v683 = vunpack.c.h.b16 %v497
      %v684 = vunpack.c.l.b16 %v498
      %v685 = vunpack.c.h.b16 %v498
      %v686 = vunpack.c.l.b16 %v499
      %v687 = vunpack.c.h.b16 %v499
      %v688 = vunpack.c.l.b16 %v500
      %v689 = vunpack.c.h.b16 %v500
      %v690 = vunpack.c.l.b16 %v501
      %v691 = vunpack.c.h.b16 %v501
      %v692 = vunpack.c.l.b16 %v502
      %v693 = vunpack.c.h.b16 %v502
      %v694 = vunpack.c.l.b16 %v503
      %v695 = vunpack.c.h.b16 %v503
      %v696 = vunpack.c.l.b16 %v504
      %v697 = vunpack.c.h.b16 %v504
      %v698 = vunpack.c.l.b16 %v505
      %v699 = vunpack.c.h.b16 %v505
      %v700 = vunpack.c.l.b16 %v506
      %v701 = vunpack.c.h.b16 %v506
      %v702 = vunpack.c.l.b16 %v507
      %v703 = vunpack.c.h.b16 %v507
      %v704 = vunpack.c.l.b16 %v508
      %v705 = vunpack.c.h.b16 %v508
      %v706 = vunpack.c.l.b16 %v509
      %v707 = vunpack.c.h.b16 %v509
      %v708 = vunpack.c.l.b16 %v510
      %v709 = vunpack.c.h.b16 %v510
      %v710 = vunpack.c.l.b16 %v511
      %v711 = vunpack.c.h.b16 %v511
      %v712 = vunpack.c.l.b16 %v512
      %v713 = vunpack.c.h.b16 %v512
      %v714 = vunpack.c.l.b16 %v513
      %v715 = vunpack.c.h.b16 %v513
      %v716 = vunpack.c.l.b16 %v514
      %v717 = vunpack.c.h.b16 %v514
      %v718 = vunpack.c.l.b16 %v515
      %v719 = vunpack.c.h.b16 %v515
      %v720 = vunpack.c.l.b16 %v516
      %v721 = vunpack.c.h.b16 %v516
      %v722 = vunpack.c.l.b16 %v517
      %v723 = vunpack.c.h.b16 %v517
      %v724 = vunpack.c.l.b16 %v518
      %v725 = vunpack.c.h.b16 %v518
      %v726 = vunpack.c.l.b16 %v519
      %v727 = vunpack.c.h.b16 %v519
      %v728 = vunpack.c.l.b16 %v520
      %v729 = vunpack.c.h.b16 %v520
      %v730 = vunpack.c.l.b16 %v521
      %v731 = vunpack.c.h.b16 %v521
      %v732 = vunpack.c.l.b16 %v522
      %v733 = vunpack.c.h.b16 %v522
      %v734 = vunpack.c.l.b16 %v523
      %v735 = vunpack.c.h.b16 %v523
      %v736 = vunpack.c.l.b16 %v524
      %v737 = vunpack.c.h.b16 %v524
      %v738 = vunpack.c.l.b16 %v525
      %v739 = vunpack.c.h.b16 %v525
      %v740 = vunpack.c.l.b16 %v526
      %v741 = vunpack.c.h.b16 %v526
      %v742 = vunpack.c.l.b16 %v527
      %v743 = vunpack.c.h.b16 %v527
      %v744 = vunpack.c.l.b16 %v528
      %v745 = vunpack.c.h.b16 %v528
      %v746 = vunpack.c.l.b16 %v529
      %v747 = vunpack.c.h.b16 %v529
      %v748 = vunpack.c.l.b16 %v530
      %v749 = vunpack.c.h.b16 %v530
      %v750 = vunpack.c.l.b16 %v531
      %v751 = vunpack.c.h.b16 %v531
      %v752 = vunpack.c.l.b16 %v532
      %v753 = vunpack.c.h.b16 %v532
      %v754 = vunpack.c.l.b16 %v533
      %v755 = vunpack.c.h.b16 %v533
      %v756 = vunpack.c.l.b16 %v534
      %v757 = vunpack.c.h.b16 %v534
      %v758 = vunpack.c.l.b16 %v535
      %v759 = vunpack.c.h.b16 %v535
      %v760 = vunpack.c.l.b16 %v536
      %v761 = vunpack.c.h.b16 %v536
      %v762 = vunpack.c.l.b16 %v537
      %v763 = vunpack.c.h.b16 %v537
      %v764 = vunpack.c.l.b16 %v538
      %v765 = vunpack.c.h.b16 %v538
      %v766 = vunpack.c.l.b16 %v539
      %v767 = vunpack.c.h.b16 %v539
      %v768 = vunpack.c.l.b16 %v540
      %v769 = vunpack.c.h.b16 %v540
      %v770 = vunpack.c.l.b16 %v541
      %v771 = vunpack.c.h.b16 %v541
      %v772 = vunpack.c.l.b16 %v542
      %v773 = vunpack.c.h.b16 %v542
      %v774 = vunpack.c.l.b16 %v543
      %v775 = vunpack.c.h.b16 %v543
      %v776 = vunpack.c.l.b16 %v544
      %v777 = vunpack.c.h.b16 %v544
      %v778 = vunpack.c.l.b16 %v545
      %v779 = vunpack.c.h.b16 %v545
      %v780 = vunpack.c.l.b16 %v546
      %v781 = vunpack.c.h.b16 %v546
      %v782 = vunpack.c.l.b16 %v547
      %v783 = vunpack.c.h.b16 %v547
      %v784 = vunpack.c.l.b16 %v548
      %v785 = vunpack.c.h.b16 %v548
      %v786 = vunpack.c.l.b16 %v549
      %v787 = vunpack.c.h.b16 %v549
      %v788 = vunpack.c.l.b16 %v550
      %v789 = vunpack.c.h.b16 %v550
      %v790 = vunpack.c.l.b16 %v551
      %v791 = vunpack.c.h.b16 %v551
      %v792 = vunpack.c.l.b16 %v552
      %v793 = vunpack.c.h.b16 %v552
      %v794 = vpack.c.b16 %v652, %v650
      %v795 = vpack.c.b16 %v653, %v651
      %v796 = vpack.c.b16 %v656, %v654
      %v797 = vpack.c.b16 %v657, %v655
      %v798 = vpack.c.b16 %v660, %v658
      %v799 = vpack.c.b16 %v661, %v659
      %v800 = vpack.c.b16 %v664, %v662
      %v801 = vpack.c.b16 %v665, %v663
      %v802 = vpack.c.b16 %v668, %v666
      %v803 = vpack.c.b16 %v669, %v667
      %v804 = vpack.c.b16 %v672, %v670
      %v805 = vpack.c.b16 %v673, %v671
      %v806 = vpack.c.b16 %v676, %v674
      %v807 = vpack.c.b16 %v677, %v675
      %v808 = vpack.c.b16 %v680, %v678
      %v809 = vpack.c.b16 %v681, %v679
      %v810 = vpack.c.b16 %v684, %v682
      %v811 = vpack.c.b16 %v685, %v683
      %v812 = vpack.c.b16 %v688, %v686
      %v813 = vpack.c.b16 %v689, %v687
      %v814 = vpack.c.b16 %v692, %v690
      %v815 = vpack.c.b16 %v693, %v691
      %v816 = vpack.c.b16 %v696, %v694
      %v817 = vpack.c.b16 %v697, %v695
      %v818 = vpack.c.b16 %v700, %v698
      %v819 = vpack.c.b16 %v701, %v699
      %v820 = vpack.c.b16 %v704, %v702
      %v821 = vpack.c.b16 %v705, %v703
      %v822 = vpack.c.b16 %v708, %v706
      %v823 = vpack.c.b16 %v709, %v707
      %v824 = vpack.c.b16 %v712, %v710
      %v825 = vpack.c.b16 %v713, %v711
      %v826 = vpack.c.b16 %v716, %v714
      %v827 = vpack.c.b16 %v717, %v715
      %v828 = vpack.c.b16 %v720, %v718
      %v829 = vpack.c.b16 %v721, %v719
      %v830 = vpack.c.b16 %v724, %v722
      %v831 = vpack.c.b16 %v725, %v723
      %v832 = vpack.c.b16 %v728, %v726
      %v833 = vpack.c.b16 %v729, %v727
      %v834 = vpack.c.b16 %v732, %v730
      %v835 = vpack.c.b16 %v733, %v731
      %v836 = vpack.c.b16 %v736, %v734
      %v837 = vpack.c.b16 %v737, %v735
      %v838 = vpack.c.b16 %v740, %v738
      %v839 = vpack.c.b16 %v741, %v739
      %v840 = vpack.c.b16 %v744, %v742
      %v841 = vpack.c.b16 %v745, %v743
      %v842 = vpack.c.b16 %v748, %v746
      %v843 = vpack.c.b16 %v749, %v747
      %v844 = vpack.c.b16 %v752, %v750
      %v845 = vpack.c.b16 %v753, %v751
      %v846 = vpack.c.b16 %v756, %v754
      %v847 = vpack.c.b16 %v757, %v755
      %v848 = vpack.c.b16 %v760, %v758
      %v849 = vpack.c.b16 %v761, %v759
      %v850 = vpack.c.b16 %v764, %v762
      %v851 = vpack.c.b16 %v765, %v763
      %v852 = vpack.c.b16 %v768, %v766
      %v853 = vpack.c.b16 %v769, %v767
      %v854 = vpack.c.b16 %v772, %v770
      %v855 = vpack.c.b16 %v773, %v771
      %v856 = vpack.c.b16 %v776, %v774
      %v857 = vpack.c.b16 %v777, %v775
      %v858 = vpack.c.b16 %v780, %v778
      %v859 = vpack.c.b16 %v781, %v779
      %v860 = vpack.c.b16 %v784, %v782
      %v861 = vpack.c.b16 %v785, %v783
      %v862 = vpack.c.b16 %v788, %v786
      %v863 = vpack.c.b16 %v789, %v787
      %v864 = vpack.c.b16 %v792, %v790
      %v865 = vpack.c.b16 %v793, %v791
      %vm938 = vcmask 523264
      %v940 = vsel %vm938, %v573, 0
      %942 = vmatpush.bf16.msra.mxu0 %v808
      %943 = vmatpush.bf16.msra.mxu0 %v806
      %944 = vmatpush.bf16.msra.mxu0 %v804
      %945 = vmatpush.bf16.msra.mxu0 %v802
      %946 = vmatpush.bf16.msra.mxu0 %v800
      %947 = vmatpush.bf16.msra.mxu0 %v798
      %948 = vmatpush.bf16.msra.mxu0 %v796
      %949 = vmatpush.bf16.msra.mxu0 %v794
      %950 = vmatmul.bf16.gmra.mxu0 %v569
      %v951 = vpop.f32.mrf.mxu0
      %v952 = vadd.f32 0.0, %v951
      %v953 = vpop.f32.mrf.mxu0
      %v954 = vadd.f32 0.0, %v953
      %955 = vdwg.mxu0
      %956 = vmatpush.bf16.msra.mxu0 %v824
      %957 = vmatpush.bf16.msra.mxu0 %v822
      %958 = vmatpush.bf16.msra.mxu0 %v820
      %959 = vmatpush.bf16.msra.mxu0 %v818
      %960 = vmatpush.bf16.msra.mxu0 %v816
      %961 = vmatpush.bf16.msra.mxu0 %v814
      %962 = vmatpush.bf16.msra.mxu0 %v812
      %963 = vmatpush.bf16.msra.mxu0 %v810
      %964 = vmatmul.bf16.gmra.mxu0 %v570
      %v965 = vpop.f32.mrf.mxu0
      %v966 = vadd.f32 %v952, %v965
      %v967 = vpop.f32.mrf.mxu0
      %v968 = vadd.f32 %v954, %v967
      %969 = vdwg.mxu0
      %970 = vmatpush.bf16.msra.mxu0 %v840
      %971 = vmatpush.bf16.msra.mxu0 %v838
      %972 = vmatpush.bf16.msra.mxu0 %v836
      %973 = vmatpush.bf16.msra.mxu0 %v834
      %974 = vmatpush.bf16.msra.mxu0 %v832
      %975 = vmatpush.bf16.msra.mxu0 %v830
      %976 = vmatpush.bf16.msra.mxu0 %v828
      %977 = vmatpush.bf16.msra.mxu0 %v826
      %978 = vmatmul.bf16.gmra.mxu0 %v571
      %v979 = vpop.f32.mrf.mxu0
      %v980 = vadd.f32 %v966, %v979
      %v981 = vpop.f32.mrf.mxu0
      %v982 = vadd.f32 %v968, %v981
      %983 = vdwg.mxu0
      %984 = vmatpush.bf16.msra.mxu0 %v856
      %985 = vmatpush.bf16.msra.mxu0 %v854
      %986 = vmatpush.bf16.msra.mxu0 %v852
      %987 = vmatpush.bf16.msra.mxu0 %v850
      %988 = vmatpush.bf16.msra.mxu0 %v848
      %989 = vmatpush.bf16.msra.mxu0 %v846
      %990 = vmatpush.bf16.msra.mxu0 %v844
      %991 = vmatpush.bf16.msra.mxu0 %v842
      %992 = vmatmul.bf16.gmra.mxu0 %v572
      %v993 = vpop.f32.mrf.mxu0
      %v994 = vadd.f32 %v980, %v993
      %v995 = vpop.f32.mrf.mxu0
      %v996 = vadd.f32 %v982, %v995
      %997 = vdwg.mxu0
      %998 = vmatpush.bf16.msra.mxu0 0
      %999 = vmatpush.bf16.msra.mxu0 0
      %1000 = vmatpush.bf16.msra.mxu0 0
      %1001 = vmatpush.bf16.msra.mxu0 0
      %1002 = vmatpush.bf16.msra.mxu0 %v864
      %1003 = vmatpush.bf16.msra.mxu0 %v862
      %1004 = vmatpush.bf16.msra.mxu0 %v860
      %1005 = vmatpush.bf16.msra.mxu0 %v858
      %1006 = vmatmul.bf16.gmra.mxu0 %v940
      %v1007 = vpop.f32.mrf.mxu0
      %v1008 = vadd.f32 %v994, %v1007
      %v1009 = vpop.f32.mrf.mxu0
      %v1010 = vadd.f32 %v996, %v1009
      %1011 = vdwg.mxu0
      %1012 = vmatpush.bf16.msra.mxu0 %v809
      %1013 = vmatpush.bf16.msra.mxu0 %v807
      %1014 = vmatpush.bf16.msra.mxu0 %v805
      %1015 = vmatpush.bf16.msra.mxu0 %v803
      %1016 = vmatpush.bf16.msra.mxu0 %v801
      %1017 = vmatpush.bf16.msra.mxu0 %v799
      %1018 = vmatpush.bf16.msra.mxu0 %v797
      %1019 = vmatpush.bf16.msra.mxu0 %v795
      %1020 = vmatmul.bf16.gmra.mxu0 %v569
      %v1021 = vpop.f32.mrf.mxu0
      %v1022 = vadd.f32 0.0, %v1021
      %v1023 = vpop.f32.mrf.mxu0
      %v1024 = vadd.f32 0.0, %v1023
      %1025 = vdwg.mxu0
      %1026 = vmatpush.bf16.msra.mxu0 %v825
      %1027 = vmatpush.bf16.msra.mxu0 %v823
      %1028 = vmatpush.bf16.msra.mxu0 %v821
      %1029 = vmatpush.bf16.msra.mxu0 %v819
      %1030 = vmatpush.bf16.msra.mxu0 %v817
      %1031 = vmatpush.bf16.msra.mxu0 %v815
      %1032 = vmatpush.bf16.msra.mxu0 %v813
      %1033 = vmatpush.bf16.msra.mxu0 %v811
      %1034 = vmatmul.bf16.gmra.mxu0 %v570
      %v1035 = vpop.f32.mrf.mxu0
      %v1036 = vadd.f32 %v1022, %v1035
      %v1037 = vpop.f32.mrf.mxu0
      %v1038 = vadd.f32 %v1024, %v1037
      %1039 = vdwg.mxu0
      %1040 = vmatpush.bf16.msra.mxu0 %v841
      %1041 = vmatpush.bf16.msra.mxu0 %v839
      %1042 = vmatpush.bf16.msra.mxu0 %v837
      %1043 = vmatpush.bf16.msra.mxu0 %v835
      %1044 = vmatpush.bf16.msra.mxu0 %v833
      %1045 = vmatpush.bf16.msra.mxu0 %v831
      %1046 = vmatpush.bf16.msra.mxu0 %v829
      %1047 = vmatpush.bf16.msra.mxu0 %v827
      %1048 = vmatmul.bf16.gmra.mxu0 %v571
      %v1049 = vpop.f32.mrf.mxu0
      %v1050 = vadd.f32 %v1036, %v1049
      %v1051 = vpop.f32.mrf.mxu0
      %v1052 = vadd.f32 %v1038, %v1051
      %1053 = vdwg.mxu0
      %1054 = vmatpush.bf16.msra.mxu0 %v857
      %1055 = vmatpush.bf16.msra.mxu0 %v855
      %1056 = vmatpush.bf16.msra.mxu0 %v853
      %1057 = vmatpush.bf16.msra.mxu0 %v851
      %1058 = vmatpush.bf16.msra.mxu0 %v849
      %1059 = vmatpush.bf16.msra.mxu0 %v847
      %1060 = vmatpush.bf16.msra.mxu0 %v845
      %1061 = vmatpush.bf16.msra.mxu0 %v843
      %1062 = vmatmul.bf16.gmra.mxu0 %v572
      %v1063 = vpop.f32.mrf.mxu0
      %v1064 = vadd.f32 %v1050, %v1063
      %v1065 = vpop.f32.mrf.mxu0
      %v1066 = vadd.f32 %v1052, %v1065
      %1067 = vdwg.mxu0
      %1068 = vmatpush.bf16.msra.mxu0 0
      %1069 = vmatpush.bf16.msra.mxu0 0
      %1070 = vmatpush.bf16.msra.mxu0 0
      %1071 = vmatpush.bf16.msra.mxu0 0
      %1072 = vmatpush.bf16.msra.mxu0 %v865
      %1073 = vmatpush.bf16.msra.mxu0 %v863
      %1074 = vmatpush.bf16.msra.mxu0 %v861
      %1075 = vmatpush.bf16.msra.mxu0 %v859
      %1076 = vmatmul.bf16.gmra.mxu0 %v940
      %v1077 = vpop.f32.mrf.mxu0
      %v1078 = vadd.f32 %v1064, %v1077
      %v1079 = vpop.f32.mrf.mxu0
      %v1080 = vadd.f32 %v1066, %v1079
      %1081 = vdwg.mxu0
      %v1088 = vunpack.c.l.b16 %v396
      %v1089 = vunpack.c.h.b16 %v396
      %v1090 = vunpack.c.l.b16 %v397
      %v1091 = vunpack.c.h.b16 %v397
      %v1092 = vunpack.c.l.b16 %v398
      %v1093 = vunpack.c.l.b16 %v399
      %v1094 = vunpack.c.h.b16 %v399
      %v1095 = vunpack.c.l.b16 %v400
      %v1096 = vunpack.c.h.b16 %v400
      %v1097 = vunpack.c.l.b16 %v401
      %v1098 = vpack.c.b16 %v1093, %v1088
      %v1099 = vpack.c.b16 %v1094, %v1089
      %v1100 = vpack.c.b16 %v1095, %v1090
      %v1101 = vpack.c.b16 %v1096, %v1091
      %v1102 = vpack.c.b16 %v1097, %v1092
      %v1179 = vunpack.c.l.b16 %v408
      %v1180 = vunpack.c.h.b16 %v408
      %v1181 = vunpack.c.l.b16 %v409
      %v1182 = vunpack.c.h.b16 %v409
      %v1183 = vunpack.c.l.b16 %v410
      %v1184 = vunpack.c.h.b16 %v410
      %v1185 = vunpack.c.l.b16 %v411
      %v1186 = vunpack.c.h.b16 %v411
      %v1187 = vunpack.c.l.b16 %v412
      %v1188 = vunpack.c.h.b16 %v412
      %v1189 = vunpack.c.l.b16 %v413
      %v1190 = vunpack.c.h.b16 %v413
      %v1191 = vunpack.c.l.b16 %v414
      %v1192 = vunpack.c.h.b16 %v414
      %v1193 = vunpack.c.l.b16 %v415
      %v1194 = vunpack.c.h.b16 %v415
      %v1195 = vunpack.c.l.b16 %v416
      %v1196 = vunpack.c.h.b16 %v416
      %v1197 = vunpack.c.l.b16 %v417
      %v1198 = vunpack.c.h.b16 %v417
      %v1199 = vunpack.c.l.b16 %v418
      %v1200 = vunpack.c.h.b16 %v418
      %v1201 = vunpack.c.l.b16 %v419
      %v1202 = vunpack.c.h.b16 %v419
      %v1203 = vunpack.c.l.b16 %v420
      %v1204 = vunpack.c.h.b16 %v420
      %v1205 = vunpack.c.l.b16 %v421
      %v1206 = vunpack.c.h.b16 %v421
      %v1207 = vunpack.c.l.b16 %v422
      %v1208 = vunpack.c.h.b16 %v422
      %v1209 = vunpack.c.l.b16 %v423
      %v1210 = vunpack.c.h.b16 %v423
      %v1211 = vunpack.c.l.b16 %v424
      %v1212 = vunpack.c.h.b16 %v424
      %v1213 = vunpack.c.l.b16 %v425
      %v1214 = vunpack.c.h.b16 %v425
      %v1215 = vunpack.c.l.b16 %v426
      %v1216 = vunpack.c.h.b16 %v426
      %v1217 = vunpack.c.l.b16 %v427
      %v1218 = vunpack.c.h.b16 %v427
      %v1219 = vunpack.c.l.b16 %v428
      %v1220 = vunpack.c.h.b16 %v428
      %v1221 = vunpack.c.l.b16 %v429
      %v1222 = vunpack.c.h.b16 %v429
      %v1223 = vunpack.c.l.b16 %v430
      %v1224 = vunpack.c.h.b16 %v430
      %v1225 = vunpack.c.l.b16 %v431
      %v1226 = vunpack.c.h.b16 %v431
      %v1227 = vunpack.c.l.b16 %v432
      %v1228 = vunpack.c.h.b16 %v432
      %v1229 = vunpack.c.l.b16 %v433
      %v1230 = vunpack.c.h.b16 %v433
      %v1231 = vunpack.c.l.b16 %v434
      %v1232 = vunpack.c.h.b16 %v434
      %v1233 = vunpack.c.l.b16 %v435
      %v1234 = vunpack.c.h.b16 %v435
      %v1235 = vunpack.c.l.b16 %v436
      %v1236 = vunpack.c.h.b16 %v436
      %v1237 = vunpack.c.l.b16 %v437
      %v1238 = vunpack.c.h.b16 %v437
      %v1239 = vunpack.c.l.b16 %v438
      %v1240 = vunpack.c.h.b16 %v438
      %v1241 = vunpack.c.l.b16 %v439
      %v1242 = vunpack.c.h.b16 %v439
      %v1243 = vunpack.c.l.b16 %v440
      %v1244 = vunpack.c.h.b16 %v440
      %v1245 = vunpack.c.l.b16 %v441
      %v1246 = vunpack.c.h.b16 %v441
      %v1247 = vunpack.c.l.b16 %v442
      %v1248 = vunpack.c.h.b16 %v442
      %v1249 = vunpack.c.l.b16 %v443
      %v1250 = vunpack.c.h.b16 %v443
      %v1251 = vunpack.c.l.b16 %v444
      %v1252 = vunpack.c.h.b16 %v444
      %v1253 = vunpack.c.l.b16 %v445
      %v1254 = vunpack.c.h.b16 %v445
      %v1255 = vunpack.c.l.b16 %v446
      %v1256 = vunpack.c.h.b16 %v446
      %v1257 = vunpack.c.l.b16 %v447
      %v1258 = vunpack.c.h.b16 %v447
      %v1259 = vunpack.c.l.b16 %v448
      %v1260 = vunpack.c.h.b16 %v448
      %v1261 = vunpack.c.l.b16 %v449
      %v1262 = vunpack.c.h.b16 %v449
      %v1263 = vunpack.c.l.b16 %v450
      %v1264 = vunpack.c.h.b16 %v450
      %v1265 = vunpack.c.l.b16 %v451
      %v1266 = vunpack.c.h.b16 %v451
      %v1267 = vunpack.c.l.b16 %v452
      %v1268 = vunpack.c.h.b16 %v452
      %v1269 = vunpack.c.l.b16 %v453
      %v1270 = vunpack.c.h.b16 %v453
      %v1271 = vunpack.c.l.b16 %v454
      %v1272 = vunpack.c.h.b16 %v454
      %v1273 = vunpack.c.l.b16 %v455
      %v1274 = vunpack.c.h.b16 %v455
      %v1275 = vunpack.c.l.b16 %v456
      %v1276 = vunpack.c.h.b16 %v456
      %v1277 = vunpack.c.l.b16 %v457
      %v1278 = vunpack.c.h.b16 %v457
      %v1279 = vunpack.c.l.b16 %v458
      %v1280 = vunpack.c.h.b16 %v458
      %v1281 = vunpack.c.l.b16 %v459
      %v1282 = vunpack.c.h.b16 %v459
      %v1283 = vunpack.c.l.b16 %v460
      %v1284 = vunpack.c.h.b16 %v460
      %v1285 = vunpack.c.l.b16 %v461
      %v1286 = vunpack.c.h.b16 %v461
      %v1287 = vunpack.c.l.b16 %v462
      %v1288 = vunpack.c.h.b16 %v462
      %v1289 = vunpack.c.l.b16 %v463
      %v1290 = vunpack.c.h.b16 %v463
      %v1291 = vunpack.c.l.b16 %v464
      %v1292 = vunpack.c.h.b16 %v464
      %v1293 = vunpack.c.l.b16 %v465
      %v1294 = vunpack.c.h.b16 %v465
      %v1295 = vunpack.c.l.b16 %v466
      %v1296 = vunpack.c.h.b16 %v466
      %v1297 = vunpack.c.l.b16 %v467
      %v1298 = vunpack.c.h.b16 %v467
      %v1299 = vunpack.c.l.b16 %v468
      %v1300 = vunpack.c.h.b16 %v468
      %v1301 = vunpack.c.l.b16 %v469
      %v1302 = vunpack.c.h.b16 %v469
      %v1303 = vunpack.c.l.b16 %v470
      %v1304 = vunpack.c.h.b16 %v470
      %v1305 = vunpack.c.l.b16 %v471
      %v1306 = vunpack.c.h.b16 %v471
      %v1307 = vunpack.c.l.b16 %v472
      %v1308 = vunpack.c.h.b16 %v472
      %v1309 = vunpack.c.l.b16 %v473
      %v1310 = vunpack.c.h.b16 %v473
      %v1311 = vunpack.c.l.b16 %v474
      %v1312 = vunpack.c.h.b16 %v474
      %v1313 = vunpack.c.l.b16 %v475
      %v1314 = vunpack.c.h.b16 %v475
      %v1315 = vunpack.c.l.b16 %v476
      %v1316 = vunpack.c.h.b16 %v476
      %v1317 = vunpack.c.l.b16 %v477
      %v1318 = vunpack.c.h.b16 %v477
      %v1319 = vunpack.c.l.b16 %v478
      %v1320 = vunpack.c.h.b16 %v478
      %v1321 = vunpack.c.l.b16 %v479
      %v1322 = vunpack.c.h.b16 %v479
      %v1323 = vpack.c.b16 %v1181, %v1179
      %v1324 = vpack.c.b16 %v1182, %v1180
      %v1325 = vpack.c.b16 %v1185, %v1183
      %v1326 = vpack.c.b16 %v1186, %v1184
      %v1327 = vpack.c.b16 %v1189, %v1187
      %v1328 = vpack.c.b16 %v1190, %v1188
      %v1329 = vpack.c.b16 %v1193, %v1191
      %v1330 = vpack.c.b16 %v1194, %v1192
      %v1331 = vpack.c.b16 %v1197, %v1195
      %v1332 = vpack.c.b16 %v1198, %v1196
      %v1333 = vpack.c.b16 %v1201, %v1199
      %v1334 = vpack.c.b16 %v1202, %v1200
      %v1335 = vpack.c.b16 %v1205, %v1203
      %v1336 = vpack.c.b16 %v1206, %v1204
      %v1337 = vpack.c.b16 %v1209, %v1207
      %v1338 = vpack.c.b16 %v1210, %v1208
      %v1339 = vpack.c.b16 %v1213, %v1211
      %v1340 = vpack.c.b16 %v1214, %v1212
      %v1341 = vpack.c.b16 %v1217, %v1215
      %v1342 = vpack.c.b16 %v1218, %v1216
      %v1343 = vpack.c.b16 %v1221, %v1219
      %v1344 = vpack.c.b16 %v1222, %v1220
      %v1345 = vpack.c.b16 %v1225, %v1223
      %v1346 = vpack.c.b16 %v1226, %v1224
      %v1347 = vpack.c.b16 %v1229, %v1227
      %v1348 = vpack.c.b16 %v1230, %v1228
      %v1349 = vpack.c.b16 %v1233, %v1231
      %v1350 = vpack.c.b16 %v1234, %v1232
      %v1351 = vpack.c.b16 %v1237, %v1235
      %v1352 = vpack.c.b16 %v1238, %v1236
      %v1353 = vpack.c.b16 %v1241, %v1239
      %v1354 = vpack.c.b16 %v1242, %v1240
      %v1355 = vpack.c.b16 %v1245, %v1243
      %v1356 = vpack.c.b16 %v1246, %v1244
      %v1357 = vpack.c.b16 %v1249, %v1247
      %v1358 = vpack.c.b16 %v1250, %v1248
      %v1359 = vpack.c.b16 %v1253, %v1251
      %v1360 = vpack.c.b16 %v1254, %v1252
      %v1361 = vpack.c.b16 %v1257, %v1255
      %v1362 = vpack.c.b16 %v1258, %v1256
      %v1363 = vpack.c.b16 %v1261, %v1259
      %v1364 = vpack.c.b16 %v1262, %v1260
      %v1365 = vpack.c.b16 %v1265, %v1263
      %v1366 = vpack.c.b16 %v1266, %v1264
      %v1367 = vpack.c.b16 %v1269, %v1267
      %v1368 = vpack.c.b16 %v1270, %v1268
      %v1369 = vpack.c.b16 %v1273, %v1271
      %v1370 = vpack.c.b16 %v1274, %v1272
      %v1371 = vpack.c.b16 %v1277, %v1275
      %v1372 = vpack.c.b16 %v1278, %v1276
      %v1373 = vpack.c.b16 %v1281, %v1279
      %v1374 = vpack.c.b16 %v1282, %v1280
      %v1375 = vpack.c.b16 %v1285, %v1283
      %v1376 = vpack.c.b16 %v1286, %v1284
      %v1377 = vpack.c.b16 %v1289, %v1287
      %v1378 = vpack.c.b16 %v1290, %v1288
      %v1379 = vpack.c.b16 %v1293, %v1291
      %v1380 = vpack.c.b16 %v1294, %v1292
      %v1381 = vpack.c.b16 %v1297, %v1295
      %v1382 = vpack.c.b16 %v1298, %v1296
      %v1383 = vpack.c.b16 %v1301, %v1299
      %v1384 = vpack.c.b16 %v1302, %v1300
      %v1385 = vpack.c.b16 %v1305, %v1303
      %v1386 = vpack.c.b16 %v1306, %v1304
      %v1387 = vpack.c.b16 %v1309, %v1307
      %v1388 = vpack.c.b16 %v1310, %v1308
      %v1389 = vpack.c.b16 %v1313, %v1311
      %v1390 = vpack.c.b16 %v1314, %v1312
      %v1391 = vpack.c.b16 %v1317, %v1315
      %v1392 = vpack.c.b16 %v1318, %v1316
      %v1393 = vpack.c.b16 %v1321, %v1319
      %v1394 = vpack.c.b16 %v1322, %v1320
      %v1468 = vsel %vm938, %v1102, 0
      %1470 = vmatpush.bf16.msra.mxu0 %v1337
      %1471 = vmatpush.bf16.msra.mxu0 %v1335
      %1472 = vmatpush.bf16.msra.mxu0 %v1333
      %1473 = vmatpush.bf16.msra.mxu0 %v1331
      %1474 = vmatpush.bf16.msra.mxu0 %v1329
      %1475 = vmatpush.bf16.msra.mxu0 %v1327
      %1476 = vmatpush.bf16.msra.mxu0 %v1325
      %1477 = vmatpush.bf16.msra.mxu0 %v1323
      %1478 = vmatmul.bf16.gmra.mxu0 %v1098
      %v1479 = vpop.f32.mrf.mxu0
      %v1480 = vadd.f32 %v1008, %v1479
      %v1481 = vpop.f32.mrf.mxu0
      %v1482 = vadd.f32 %v1010, %v1481
      %1483 = vdwg.mxu0
      %1484 = vmatpush.bf16.msra.mxu0 %v1353
      %1485 = vmatpush.bf16.msra.mxu0 %v1351
      %1486 = vmatpush.bf16.msra.mxu0 %v1349
      %1487 = vmatpush.bf16.msra.mxu0 %v1347
      %1488 = vmatpush.bf16.msra.mxu0 %v1345
      %1489 = vmatpush.bf16.msra.mxu0 %v1343
      %1490 = vmatpush.bf16.msra.mxu0 %v1341
      %1491 = vmatpush.bf16.msra.mxu0 %v1339
      %1492 = vmatmul.bf16.gmra.mxu0 %v1099
      %v1493 = vpop.f32.mrf.mxu0
      %v1494 = vadd.f32 %v1480, %v1493
      %v1495 = vpop.f32.mrf.mxu0
      %v1496 = vadd.f32 %v1482, %v1495
      %1497 = vdwg.mxu0
      %1498 = vmatpush.bf16.msra.mxu0 %v1369
      %1499 = vmatpush.bf16.msra.mxu0 %v1367
      %1500 = vmatpush.bf16.msra.mxu0 %v1365
      %1501 = vmatpush.bf16.msra.mxu0 %v1363
      %1502 = vmatpush.bf16.msra.mxu0 %v1361
      %1503 = vmatpush.bf16.msra.mxu0 %v1359
      %1504 = vmatpush.bf16.msra.mxu0 %v1357
      %1505 = vmatpush.bf16.msra.mxu0 %v1355
      %1506 = vmatmul.bf16.gmra.mxu0 %v1100
      %v1507 = vpop.f32.mrf.mxu0
      %v1508 = vadd.f32 %v1494, %v1507
      %v1509 = vpop.f32.mrf.mxu0
      %v1510 = vadd.f32 %v1496, %v1509
      %1511 = vdwg.mxu0
      %1512 = vmatpush.bf16.msra.mxu0 %v1385
      %1513 = vmatpush.bf16.msra.mxu0 %v1383
      %1514 = vmatpush.bf16.msra.mxu0 %v1381
      %1515 = vmatpush.bf16.msra.mxu0 %v1379
      %1516 = vmatpush.bf16.msra.mxu0 %v1377
      %1517 = vmatpush.bf16.msra.mxu0 %v1375
      %1518 = vmatpush.bf16.msra.mxu0 %v1373
      %1519 = vmatpush.bf16.msra.mxu0 %v1371
      %1520 = vmatmul.bf16.gmra.mxu0 %v1101
      %v1521 = vpop.f32.mrf.mxu0
      %v1522 = vadd.f32 %v1508, %v1521
      %v1523 = vpop.f32.mrf.mxu0
      %v1524 = vadd.f32 %v1510, %v1523
      %1525 = vdwg.mxu0
      %1526 = vmatpush.bf16.msra.mxu0 0
      %1527 = vmatpush.bf16.msra.mxu0 0
      %1528 = vmatpush.bf16.msra.mxu0 0
      %1529 = vmatpush.bf16.msra.mxu0 0
      %1530 = vmatpush.bf16.msra.mxu0 %v1393
      %1531 = vmatpush.bf16.msra.mxu0 %v1391
      %1532 = vmatpush.bf16.msra.mxu0 %v1389
      %1533 = vmatpush.bf16.msra.mxu0 %v1387
      %1534 = vmatmul.bf16.gmra.mxu0 %v1468
      %v1535 = vpop.f32.mrf.mxu0
      %v1536 = vadd.f32 %v1522, %v1535
      %v1537 = vpop.f32.mrf.mxu0
      %v1538 = vadd.f32 %v1524, %v1537
      %1539 = vdwg.mxu0
      %1540 = vmatpush.bf16.msra.mxu0 %v1338
      %1541 = vmatpush.bf16.msra.mxu0 %v1336
      %1542 = vmatpush.bf16.msra.mxu0 %v1334
      %1543 = vmatpush.bf16.msra.mxu0 %v1332
      %1544 = vmatpush.bf16.msra.mxu0 %v1330
      %1545 = vmatpush.bf16.msra.mxu0 %v1328
      %1546 = vmatpush.bf16.msra.mxu0 %v1326
      %1547 = vmatpush.bf16.msra.mxu0 %v1324
      %1548 = vmatmul.bf16.gmra.mxu0 %v1098
      %v1549 = vpop.f32.mrf.mxu0
      %v1550 = vadd.f32 %v1078, %v1549
      %v1551 = vpop.f32.mrf.mxu0
      %v1552 = vadd.f32 %v1080, %v1551
      %1553 = vdwg.mxu0
      %1554 = vmatpush.bf16.msra.mxu0 %v1354
      %1555 = vmatpush.bf16.msra.mxu0 %v1352
      %1556 = vmatpush.bf16.msra.mxu0 %v1350
      %1557 = vmatpush.bf16.msra.mxu0 %v1348
      %1558 = vmatpush.bf16.msra.mxu0 %v1346
      %1559 = vmatpush.bf16.msra.mxu0 %v1344
      %1560 = vmatpush.bf16.msra.mxu0 %v1342
      %1561 = vmatpush.bf16.msra.mxu0 %v1340
      %1562 = vmatmul.bf16.gmra.mxu0 %v1099
      %v1563 = vpop.f32.mrf.mxu0
      %v1564 = vadd.f32 %v1550, %v1563
      %v1565 = vpop.f32.mrf.mxu0
      %v1566 = vadd.f32 %v1552, %v1565
      %1567 = vdwg.mxu0
      %1568 = vmatpush.bf16.msra.mxu0 %v1370
      %1569 = vmatpush.bf16.msra.mxu0 %v1368
      %1570 = vmatpush.bf16.msra.mxu0 %v1366
      %1571 = vmatpush.bf16.msra.mxu0 %v1364
      %1572 = vmatpush.bf16.msra.mxu0 %v1362
      %1573 = vmatpush.bf16.msra.mxu0 %v1360
      %1574 = vmatpush.bf16.msra.mxu0 %v1358
      %1575 = vmatpush.bf16.msra.mxu0 %v1356
      %1576 = vmatmul.bf16.gmra.mxu0 %v1100
      %v1577 = vpop.f32.mrf.mxu0
      %v1578 = vadd.f32 %v1564, %v1577
      %v1579 = vpop.f32.mrf.mxu0
      %v1580 = vadd.f32 %v1566, %v1579
      %1581 = vdwg.mxu0
      %1582 = vmatpush.bf16.msra.mxu0 %v1386
      %1583 = vmatpush.bf16.msra.mxu0 %v1384
      %1584 = vmatpush.bf16.msra.mxu0 %v1382
      %1585 = vmatpush.bf16.msra.mxu0 %v1380
      %1586 = vmatpush.bf16.msra.mxu0 %v1378
      %1587 = vmatpush.bf16.msra.mxu0 %v1376
      %1588 = vmatpush.bf16.msra.mxu0 %v1374
      %1589 = vmatpush.bf16.msra.mxu0 %v1372
      %1590 = vmatmul.bf16.gmra.mxu0 %v1101
      %v1591 = vpop.f32.mrf.mxu0
      %v1592 = vadd.f32 %v1578, %v1591
      %v1593 = vpop.f32.mrf.mxu0
      %v1594 = vadd.f32 %v1580, %v1593
      %1595 = vdwg.mxu0
      %1596 = vmatpush.bf16.msra.mxu0 0
      %1597 = vmatpush.bf16.msra.mxu0 0
      %1598 = vmatpush.bf16.msra.mxu0 0
      %1599 = vmatpush.bf16.msra.mxu0 0
      %1600 = vmatpush.bf16.msra.mxu0 %v1394
      %1601 = vmatpush.bf16.msra.mxu0 %v1392
      %1602 = vmatpush.bf16.msra.mxu0 %v1390
      %1603 = vmatpush.bf16.msra.mxu0 %v1388
      %1604 = vmatmul.bf16.gmra.mxu0 %v1468
      %v1605 = vpop.f32.mrf.mxu0
      %v1606 = vadd.f32 %v1592, %v1605
      %v1607 = vpop.f32.mrf.mxu0
      %v1608 = vadd.f32 %v1594, %v1607
      %1609 = vdwg.mxu0
      %v1611 = vperm.slane %v395, 0
      %v1612 = vperm.slane %v395, 1
      %v1615 = vadd.f32 %v1536, %v1611
      %v1616 = vadd.f32 %v1606, %v1612
      %v1617 = vadd.f32 %v1538, %v1611
      %v1618 = vadd.f32 %v1608, %v1612
      %v1619 = vmax.f32 %v1615, 0.0
      %v1620 = vmax.f32 %v1616, 0.0
      %v1621 = vmax.f32 %v1617, 0.0
      %v1622 = vmax.f32 %v1618, 0.0
      %1623 = vst [vmem:[%s263] sm:$0xff] %v1619
      %1624 = vst [vmem:[%s263 + $0x8] sm:$0xff] %v1620
      %1625 = vst [vmem:[%s263 + $0x10] sm:$0xff] %v1621
      %1626 = vst [vmem:[%s263 + $0x18] sm:$0xff] %v1622
      %s1627 = smul.u32 2, %s15
      %p1628 = scmp.lt.s32.totalorder %s1627, 3
      %s1629 = scalar_select %p1628, %s1627, 3
      %s1630 = smul.addr %s1629, 2
      %s1631 = smul.addr %s1630, 8
      %s1632 = scalar_lea.vmem %s4, %s1631
      // Predicated region
      $region37: #{fuse_module_forward.1} parent=35 // pred_check
        %p1633 = pneg %p131
      $region38: #{fuse_module_forward.1} parent=35 // pred_check_branch
        %1635 = sbr.rel (%p1633) target = $region40
      $region39: #{fuse_module_forward.1} parent=35 // pred_region
        %s1636 = smul.u32 2, %s15
      $region40: #{fuse_module_forward.1} parent=35 // pred_fallthru
        _
    $region36: #{fuse_module_forward.1} parent=5 // pred_fallthru
      _
    %p1637 = scmp.le.s32.totalorder 2, %s10
    // Predicated region
    $region41: #{fuse_module_forward.1} parent=5 // pred_check
      %p1638 = pneg %p1637
    $region42: #{fuse_module_forward.1} parent=5 // pred_check_branch
      %1640 = sbr.rel (%p1638) target = $region44
    $region43: #{fuse_module_forward.1} parent=5 // pred_region
      %s1641 = ssub.s32 %s10, 2
      // Predicated region
      $region45: #{fuse_module_forward.1} parent=43 // pred_check
        %p1642 = pneg %p137
      $region46: #{fuse_module_forward.1} parent=43 // pred_check_branch
        %1644 = sbr.rel (%p1642) target = $region48
      $region47: #{fuse_module_forward.1} parent=43 // pred_region
        %s1645 = smul.u32 2, %s16
        %p1646 = scmp.lt.s32.totalorder %s1645, 3
        %s1647 = scalar_select %p1646, %s1645, 3
        %s1648 = smul.addr %s1647, 2
        %s1649 = smul.addr %s1648, 8
        %s1650 = scalar_lea.vmem %s4, %s1649
      $region48: #{fuse_module_forward.1} parent=43 // pred_fallthru
        _
    $region44: #{fuse_module_forward.1} parent=5 // pred_fallthru
      _
  $region6: #{fuse_module_forward.1} parent=0 // loop_footer
    %s14 = sadd.s32 1, %s10
  $region7: #{fuse_module_forward.1} parent=0 // loop_footer_branch
    %9 = sbr.rel target = $region3
  $region8: #{fuse_module_forward.1} parent=0 // loop_exit
    _

</llo_original>
